<compile_context>
chip_gen: v6e
topology: v6e:2x2x1
jax: 0.10.0
libtpu: 0.0.40
codegen_flags: <defaults>
</compile_context>

<pallas_src>
import jax
import jax.numpy as jnp
from jax.experimental import pallas as pl
from jax.experimental.pallas import tpu as pltpu

# ---- constants implied by the module __init__ ------------------------------
OBS_HIST_LEN = 20                  # hardcoded in StudentExtractor for priv_model_extractor
CHANNEL_SIZE = 10
C_REG = 3 * CHANNEL_SIZE           # 30  (channel_regular_encoder width)
C1_OUT = 2 * CHANNEL_SIZE          # 20  (conv1 out channels)
C2_OUT = CHANNEL_SIZE              # 10  (conv2 out channels)
K1, K2, STRIDE = 6, 4, 2
T1 = (OBS_HIST_LEN - K1) // STRIDE + 1   # 8
T2 = (T1 - K2) // STRIDE + 1             # 3 == obs_history_len // 4 - 2

GROUP_T = 4                        # time steps folded per grouped first-layer matmul (20 % 4 == 0)
P_REG = 32                         # per-time-step reg width padded 30 -> 32 (GROUP_T*P_REG = 128 lanes)

WEIGHT_KEYS = ('w_g', 'b_g', 'w_t1', 'b_t1', 'w_t2', 'b_t2', 'w_out', 'b_out',
               'w_p1', 'b_p1', 'w_p2', 'b_p2', 'w_p3', 'b_p3')


def _elu(x):
    # PyTorch nn.ELU(alpha=1.0), evaluated in f32.
    return jnp.where(x > 0, x, jnp.exp(jnp.minimum(x, 0.0)) - 1.0)


# ---- the Pallas kernel (one grid step == one TB-row batch tile) -------------
def _make_kernel(n_groups, group_in):
    def kernel(x_ref, xl_ref,
               w_g_ref, b_g_ref, w_t1_ref, b_t1_ref, w_t2_ref, b_t2_ref,
               w_out_ref, b_out_ref, w_p1_ref, b_p1_ref, w_p2_ref, b_p2_ref,
               w_p3_ref, b_p3_ref, out_ref):
        f32, bf16 = jnp.float32, jnp.bfloat16
        xf = x_ref[...]                                   # (TB, 20*obs_dim) bf16

        # --- ObsHistoryEncoder --------------------------------------------------
        # Per-time-step Linear(obs_dim,30)+ELU as n_groups lane-aligned sub-matmuls
        # (GROUP_T identical blocks on the diagonal of each (group_in, 128) weight).
        wg = w_g_ref[...]
        bg = b_g_ref[...]
        parts = []
        for g in range(n_groups):                          # static unroll (5 iterations)
            xg = xf[:, g * group_in:(g + 1) * group_in]    # (TB, group_in), 128-aligned slice
            r = jnp.dot(xg, wg, preferred_element_type=f32) + bg
            parts.append(_elu(r).astype(bf16))             # (TB, 128), pad cols are exactly 0
        reg = jnp.concatenate(parts, axis=-1)              # (TB, 20*P_REG = 640) bf16, time-major

        # Conv1d(30->20,k6,s2) and Conv1d(20->10,k4,s2) folded to block-Toeplitz matmuls.
        h1 = _elu(jnp.dot(reg, w_t1_ref[...], preferred_element_type=f32)
                  + b_t1_ref[...]).astype(bf16)            # (TB, 8*20 = 160)
        h2 = _elu(jnp.dot(h1, w_t2_ref[...], preferred_element_type=f32)
                  + b_t2_ref[...]).astype(bf16)            # (TB, 3*10 = 30)
        pm = jnp.tanh(jnp.dot(h2, w_out_ref[...], preferred_element_type=f32)
                      + b_out_ref[...])                    # (TB, output_dim) f32

        # --- StudentPrivStateExtractor: MLP(obs_dim -> 128 -> 64 -> 3) -----------
        xl = xl_ref[...]                                   # (TB, obs_dim) bf16 (== x[:, -obs_dim:])
        h = _elu(jnp.dot(xl, w_p1_ref[...], preferred_element_type=f32)
                 + b_p1_ref[...]).astype(bf16)             # (TB, 128)
        h = _elu(jnp.dot(h, w_p2_ref[...], preferred_element_type=f32)
                 + b_p2_ref[...]).astype(bf16)             # (TB, 64)
        ps = jnp.dot(h, w_p3_ref[...], preferred_element_type=f32) + b_p3_ref[...]   # (TB, 3) f32

        # Single lane-combined output block; wrapper splits [priv_model | priv_state].
        out_ref[...] = jnp.concatenate([pm, ps], axis=-1).astype(out_ref.dtype)
    return kernel


# ---- parameter init (deterministic, synthetic, "module-layout" params) ------
def init_params(key, obs_dim, output_dim):
    ks = jax.random.split(key, 14)

    def n(k, shape, scale=0.2):
        return jax.random.normal(k, shape, dtype=jnp.float32) * scale

    return dict(
        w_lin=n(ks[0], (obs_dim, C_REG)),            b_lin=n(ks[1], (1, C_REG), 0.05),
        w_c1=n(ks[2], (K1, C_REG, C1_OUT)),          b_c1=n(ks[3], (1, C1_OUT), 0.05),
        w_c2=n(ks[4], (K2, C1_OUT, C2_OUT)),         b_c2=n(ks[5], (1, C2_OUT), 0.05),
        w_out=n(ks[6], (T2, C2_OUT, output_dim)),    b_out=n(ks[7], (1, output_dim), 0.05),
        w_p1=n(ks[8], (obs_dim, 128)),               b_p1=n(ks[9], (1, 128), 0.05),
        w_p2=n(ks[10], (128, 64)),                   b_p2=n(ks[11], (1, 64), 0.05),
        w_p3=n(ks[12], (64, 3)),                     b_p3=n(ks[13], (1, 3), 0.05),
    )


# ---- host-side weight folding (done once, outside the kernel) ----------------
def _block_toeplitz(w, t_in, t_out, stride, in_width):
    # w: (K, C_in, C_out) -> (t_in*in_width, t_out*C_out) strided-conv unfold matrix.
    # Input time step t occupies rows [t*in_width, t*in_width + C_in); extra pad rows stay 0.
    K, c_in, c_out = w.shape
    W = jnp.zeros((t_in * in_width, t_out * c_out), jnp.float32)
    for l in range(t_out):
        for k in range(K):
            t = stride * l + k
            W = W.at[t * in_width: t * in_width + c_in,
                     l * c_out:(l + 1) * c_out].set(w[k])
    return W


def fold_params(p, obs_dim, output_dim):
    f32, bf16 = jnp.float32, jnp.bfloat16
    # Per-time-step Linear padded to P_REG output slots (pad cols/bias are 0 -> ELU(0) = 0,
    # and the matching w_t1 rows are 0, so the fold is exact).
    w_lin_p = jnp.zeros((obs_dim, P_REG), f32).at[:, :C_REG].set(p['w_lin'])
    b_lin_p = jnp.zeros((1, P_REG), f32).at[:, :C_REG].set(p['b_lin'])
    # One grouped block-diagonal weight shared by every group of GROUP_T time steps.
    w_g = jnp.kron(jnp.eye(GROUP_T, dtype=f32), w_lin_p)           # (GROUP_T*obs_dim, 128)
    b_g = jnp.tile(b_lin_p, (1, GROUP_T))                          # (1, 128)
    # Conv1d layers as block-Toeplitz matmuls (conv1 consumes the P_REG-padded reg layout).
    w_t1 = _block_toeplitz(p['w_c1'], OBS_HIST_LEN, T1, STRIDE, P_REG)   # (640, 160)
    b_t1 = jnp.tile(p['b_c1'], (1, T1))                                  # (1, 160)
    w_t2 = _block_toeplitz(p['w_c2'], T1, T2, STRIDE, C1_OUT)            # (160, 30)
    b_t2 = jnp.tile(p['b_c2'], (1, T2))                                  # (1, 30)
    # output_mlp: h2 is time-major (l*10 + c); the synthetic (T2, C2_OUT, out) layout matches.
    w_out = p['w_out'].reshape(T2 * C2_OUT, output_dim)                  # (30, out)
    # Matmul weights in bf16 (MXU full rate); biases stay f32 (added post-accumulation).
    return dict(
        w_g=w_g.astype(bf16), b_g=b_g,
        w_t1=w_t1.astype(bf16), b_t1=b_t1,
        w_t2=w_t2.astype(bf16), b_t2=b_t2,
        w_out=w_out.astype(bf16), b_out=p['b_out'],
        w_p1=p['w_p1'].astype(bf16), b_p1=p['b_p1'],
        w_p2=p['w_p2'].astype(bf16), b_p2=p['b_p2'],
        w_p3=p['w_p3'].astype(bf16), b_p3=p['b_p3'],
    )


# ---- host wrapper ------------------------------------------------------------
def student_extractor_forward(x, folded, obs_dim, output_dim, batch_tile=1024):
    B = x.shape[0]
    hd = OBS_HIST_LEN * obs_dim
    x = x.astype(jnp.float32).reshape(B, hd)
    xb = x.astype(jnp.bfloat16)                       # bf16 halves the x DMA bytes
    xlb = x[:, hd - obs_dim:].astype(jnp.bfloat16)    # priv-state input, separate tiny stream

    def rup(a, m):
        return ((a + m - 1) // m) * m

    # Batch tile selection: big tiles to amortize per-step overhead, but keep >=2 grid blocks
    # whenever the batch allows it (so the "parallel" axis can shard across v7x's 2 TCs).
    if B >= 2 * batch_tile:
        TB = batch_tile
    elif B > batch_tile:
        TB = rup((B + 1) // 2, 8)
    else:
        TB = max(8, rup(B, 8))
    B_pad = rup(B, TB)
    if B_pad != B:
        xb = jnp.pad(xb, ((0, B_pad - B), (0, 0)))
        xlb = jnp.pad(xlb, ((0, B_pad - B), (0, 0)))
    grid = (B_pad // TB,)

    weights = tuple(folded[k] for k in WEIGHT_KEYS)
    in_specs = [pl.BlockSpec((TB, hd), lambda b: (b, 0)),
                pl.BlockSpec((TB, obs_dim), lambda b: (b, 0))] + [
        pl.BlockSpec(w.shape, lambda b: (0, 0)) for w in weights   # resident across the grid
    ]
    out_dim_tot = output_dim + 3
    out_specs = pl.BlockSpec((TB, out_dim_tot), lambda b: (b, 0))
    out_shape = jax.ShapeDtypeStruct((B_pad, out_dim_tot), jnp.float32)

    kernel = _make_kernel(n_groups=OBS_HIST_LEN // GROUP_T,
                          group_in=GROUP_T * obs_dim)

    out = pl.pallas_call(
        kernel,
        out_shape=out_shape,
        grid_spec=pltpu.PrefetchScalarGridSpec(
            num_scalar_prefetch=0,
            grid=grid,
            in_specs=in_specs,
            out_specs=out_specs),
        compiler_params=pltpu.CompilerParams(
            dimension_semantics=("parallel",)),   # B-blocks shard across TCs on v7x
    )(xb, xlb, *weights)

    priv_model = out[:B, :output_dim]
    priv_state = out[:B, output_dim:]
    elevation_map_extracted = None   # StudentElevationMapExtractor.forward returns None
    prop_state_extracted = None      # StudentPropStateExtractor.forward returns None
    return (elevation_map_extracted, priv_model, priv_state, prop_state_extracted)


# ---- pure-JAX f32 reference (uses the RAW, unfolded params) -------------------
def reference_forward(x, p, obs_dim):
    B = x.shape[0]
    reg = _elu(x.reshape(-1, obs_dim) @ p['w_lin'] + p['b_lin'])
    reg = reg.reshape(B, OBS_HIST_LEN, C_REG)
    patches1 = jnp.stack([reg[:, STRIDE * l:STRIDE * l + K1, :] for l in range(T1)], axis=1)
    h1 = _elu(jnp.einsum('blkc,kcd->bld', patches1, p['w_c1']) + p['b_c1'])
    patches2 = jnp.stack([h1[:, STRIDE * l:STRIDE * l + K2, :] for l in range(T2)], axis=1)
    h2 = _elu(jnp.einsum('blkc,kcd->bld', patches2, p['w_c2']) + p['b_c2'])
    pm = jnp.tanh(jnp.einsum('blc,lcd->bd', h2, p['w_out']) + p['b_out'])
    xl = x[:, -obs_dim:]
    h = _elu(xl @ p['w_p1'] + p['b_p1'])
    h = _elu(h @ p['w_p2'] + p['b_p2'])
    ps = h @ p['w_p3'] + p['b_p3']
    return pm, ps


if __name__ == "__main__":
    obs_dim, output_dim, B = 32, 16, 4
    key = jax.random.PRNGKey(0)
    k_x, k_p = jax.random.split(key)
    x = jax.random.normal(k_x, (B, OBS_HIST_LEN * obs_dim), dtype=jnp.float32)
    params = init_params(k_p, obs_dim, output_dim)
    folded = fold_params(params, obs_dim, output_dim)

    outs = student_extractor_forward(x, folded, obs_dim, output_dim)
    jax.block_until_ready(outs[1])
    jax.block_until_ready(outs[2])

    ref_pm, ref_ps = reference_forward(x, params, obs_dim)
    assert outs[0] is None and outs[3] is None
    assert outs[1].shape == (B, output_dim) and outs[2].shape == (B, 3)
    # bf16 matmul operands -> relaxed tolerance vs the f32 reference (per review).
    assert jnp.allclose(outs[1], ref_pm, atol=5e-2, rtol=5e-2)
    assert jnp.allclose(outs[2], ref_ps, atol=5e-2, rtol=5e-2)
    print("KERNEL_OK")
</pallas_src>

<mosaic_0001>
module attributes {stable_mosaic.version = 11 : i64} {
  func.func @kernel(%arg0: i32, %arg1: memref<8x640xbf16, #tpu.memory_space<vmem>>, %arg2: memref<8x32xbf16, #tpu.memory_space<vmem>>, %arg3: memref<128x128xbf16, #tpu.memory_space<vmem>>, %arg4: memref<1x128xf32, #tpu.memory_space<vmem>>, %arg5: memref<640x160xbf16, #tpu.memory_space<vmem>>, %arg6: memref<1x160xf32, #tpu.memory_space<vmem>>, %arg7: memref<160x30xbf16, #tpu.memory_space<vmem>>, %arg8: memref<1x30xf32, #tpu.memory_space<vmem>>, %arg9: memref<30x16xbf16, #tpu.memory_space<vmem>>, %arg10: memref<1x16xf32, #tpu.memory_space<vmem>>, %arg11: memref<32x128xbf16, #tpu.memory_space<vmem>>, %arg12: memref<1x128xf32, #tpu.memory_space<vmem>>, %arg13: memref<128x64xbf16, #tpu.memory_space<vmem>>, %arg14: memref<1x64xf32, #tpu.memory_space<vmem>>, %arg15: memref<64x3xbf16, #tpu.memory_space<vmem>>, %arg16: memref<1x3xf32, #tpu.memory_space<vmem>>, %arg17: memref<8x19xf32, #tpu.memory_space<vmem>>) attributes {dimension_semantics = [#tpu.dimension_semantics<parallel>], iteration_bounds = array<i64: 1>, scalar_prefetch = 0 : i64, scratch_operands = 0 : i64, tpu.core_type = #tpu.core_type<tc>, window_params = [{transform_indices = @transform_0, window_bounds = array<i64: 8, 640>}, {transform_indices = @transform_1, window_bounds = array<i64: 8, 32>}, {pipeline_mode = #tpu.pipeline_mode<synchronous>, transform_indices = @transform_2, window_bounds = array<i64: 128, 128>}, {pipeline_mode = #tpu.pipeline_mode<synchronous>, transform_indices = @transform_3, window_bounds = array<i64: 1, 128>}, {pipeline_mode = #tpu.pipeline_mode<synchronous>, transform_indices = @transform_4, window_bounds = array<i64: 640, 160>}, {pipeline_mode = #tpu.pipeline_mode<synchronous>, transform_indices = @transform_5, window_bounds = array<i64: 1, 160>}, {pipeline_mode = #tpu.pipeline_mode<synchronous>, transform_indices = @transform_6, window_bounds = array<i64: 160, 30>}, {pipeline_mode = #tpu.pipeline_mode<synchronous>, transform_indices = @transform_7, window_bounds = array<i64: 1, 30>}, {pipeline_mode = #tpu.pipeline_mode<synchronous>, transform_indices = @transform_8, window_bounds = array<i64: 30, 16>}, {pipeline_mode = #tpu.pipeline_mode<synchronous>, transform_indices = @transform_9, window_bounds = array<i64: 1, 16>}, {pipeline_mode = #tpu.pipeline_mode<synchronous>, transform_indices = @transform_10, window_bounds = array<i64: 32, 128>}, {pipeline_mode = #tpu.pipeline_mode<synchronous>, transform_indices = @transform_11, window_bounds = array<i64: 1, 128>}, {pipeline_mode = #tpu.pipeline_mode<synchronous>, transform_indices = @transform_12, window_bounds = array<i64: 128, 64>}, {pipeline_mode = #tpu.pipeline_mode<synchronous>, transform_indices = @transform_13, window_bounds = array<i64: 1, 64>}, {pipeline_mode = #tpu.pipeline_mode<synchronous>, transform_indices = @transform_14, window_bounds = array<i64: 64, 3>}, {pipeline_mode = #tpu.pipeline_mode<synchronous>, transform_indices = @transform_15, window_bounds = array<i64: 1, 3>}, {transform_indices = @transform_16, window_bounds = array<i64: 8, 19>}]} {
    %c0 = arith.constant 0 : index
    %c0_0 = arith.constant 0 : index
    %0 = vector.load %arg1[%c0, %c0_0] : memref<8x640xbf16, #tpu.memory_space<vmem>>, vector<8x640xbf16>
    %c0_1 = arith.constant 0 : index
    %c0_2 = arith.constant 0 : index
    %1 = vector.load %arg3[%c0_1, %c0_2] : memref<128x128xbf16, #tpu.memory_space<vmem>>, vector<128x128xbf16>
    %c0_3 = arith.constant 0 : index
    %c0_4 = arith.constant 0 : index
    %2 = vector.load %arg4[%c0_3, %c0_4] : memref<1x128xf32, #tpu.memory_space<vmem>>, vector<1x128xf32>
    %3 = vector.extract_strided_slice %0 {offsets = [0, 0], sizes = [8, 128], strides = [1, 1]} : vector<8x640xbf16> to vector<8x128xbf16>
    %cst = arith.constant dense<0.000000e+00> : vector<8x128xf32>
    %4 = tpu.matmul %3, %1, %cst {dimension_numbers = #tpu.dot_dimension_numbers<[1], [0], [0], [1], [0, 0, 1, 1], [], []>} : vector<8x128xbf16>, vector<128x128xbf16>, vector<8x128xf32> -> vector<8x128xf32>
    %5 = vector.broadcast %2 : vector<1x128xf32> to vector<8x128xf32>
    %6 = arith.addf %4, %5 : vector<8x128xf32>
    %cst_5 = arith.constant 0.000000e+00 : f32
    %7 = vector.broadcast %cst_5 : f32 to vector<8x128xf32>
    %8 = arith.cmpf ogt, %6, %7 : vector<8x128xf32>
    %cst_6 = arith.constant 0.000000e+00 : f32
    %9 = vector.broadcast %cst_6 : f32 to vector<8x128xf32>
    %10 = arith.minimumf %6, %9 : vector<8x128xf32>
    %11 = math.exp %10 : vector<8x128xf32>
    %cst_7 = arith.constant 1.000000e+00 : f32
    %12 = vector.broadcast %cst_7 : f32 to vector<8x128xf32>
    %13 = arith.subf %11, %12 : vector<8x128xf32>
    %14 = arith.select %8, %6, %13 : vector<8x128xi1>, vector<8x128xf32>
    %15 = arith.truncf %14 : vector<8x128xf32> to vector<8x128xbf16>
    %16 = vector.extract_strided_slice %0 {offsets = [0, 128], sizes = [8, 128], strides = [1, 1]} : vector<8x640xbf16> to vector<8x128xbf16>
    %cst_8 = arith.constant dense<0.000000e+00> : vector<8x128xf32>
    %17 = tpu.matmul %16, %1, %cst_8 {dimension_numbers = #tpu.dot_dimension_numbers<[1], [0], [0], [1], [0, 0, 1, 1], [], []>} : vector<8x128xbf16>, vector<128x128xbf16>, vector<8x128xf32> -> vector<8x128xf32>
    %18 = vector.broadcast %2 : vector<1x128xf32> to vector<8x128xf32>
    %19 = arith.addf %17, %18 : vector<8x128xf32>
    %cst_9 = arith.constant 0.000000e+00 : f32
    %20 = vector.broadcast %cst_9 : f32 to vector<8x128xf32>
    %21 = arith.cmpf ogt, %19, %20 : vector<8x128xf32>
    %cst_10 = arith.constant 0.000000e+00 : f32
    %22 = vector.broadcast %cst_10 : f32 to vector<8x128xf32>
    %23 = arith.minimumf %19, %22 : vector<8x128xf32>
    %24 = math.exp %23 : vector<8x128xf32>
    %cst_11 = arith.constant 1.000000e+00 : f32
    %25 = vector.broadcast %cst_11 : f32 to vector<8x128xf32>
    %26 = arith.subf %24, %25 : vector<8x128xf32>
    %27 = arith.select %21, %19, %26 : vector<8x128xi1>, vector<8x128xf32>
    %28 = arith.truncf %27 : vector<8x128xf32> to vector<8x128xbf16>
    %29 = vector.extract_strided_slice %0 {offsets = [0, 256], sizes = [8, 128], strides = [1, 1]} : vector<8x640xbf16> to vector<8x128xbf16>
    %cst_12 = arith.constant dense<0.000000e+00> : vector<8x128xf32>
    %30 = tpu.matmul %29, %1, %cst_12 {dimension_numbers = #tpu.dot_dimension_numbers<[1], [0], [0], [1], [0, 0, 1, 1], [], []>} : vector<8x128xbf16>, vector<128x128xbf16>, vector<8x128xf32> -> vector<8x128xf32>
    %31 = vector.broadcast %2 : vector<1x128xf32> to vector<8x128xf32>
    %32 = arith.addf %30, %31 : vector<8x128xf32>
    %cst_13 = arith.constant 0.000000e+00 : f32
    %33 = vector.broadcast %cst_13 : f32 to vector<8x128xf32>
    %34 = arith.cmpf ogt, %32, %33 : vector<8x128xf32>
    %cst_14 = arith.constant 0.000000e+00 : f32
    %35 = vector.broadcast %cst_14 : f32 to vector<8x128xf32>
    %36 = arith.minimumf %32, %35 : vector<8x128xf32>
    %37 = math.exp %36 : vector<8x128xf32>
    %cst_15 = arith.constant 1.000000e+00 : f32
    %38 = vector.broadcast %cst_15 : f32 to vector<8x128xf32>
    %39 = arith.subf %37, %38 : vector<8x128xf32>
    %40 = arith.select %34, %32, %39 : vector<8x128xi1>, vector<8x128xf32>
    %41 = arith.truncf %40 : vector<8x128xf32> to vector<8x128xbf16>
    %42 = vector.extract_strided_slice %0 {offsets = [0, 384], sizes = [8, 128], strides = [1, 1]} : vector<8x640xbf16> to vector<8x128xbf16>
    %cst_16 = arith.constant dense<0.000000e+00> : vector<8x128xf32>
    %43 = tpu.matmul %42, %1, %cst_16 {dimension_numbers = #tpu.dot_dimension_numbers<[1], [0], [0], [1], [0, 0, 1, 1], [], []>} : vector<8x128xbf16>, vector<128x128xbf16>, vector<8x128xf32> -> vector<8x128xf32>
    %44 = vector.broadcast %2 : vector<1x128xf32> to vector<8x128xf32>
    %45 = arith.addf %43, %44 : vector<8x128xf32>
    %cst_17 = arith.constant 0.000000e+00 : f32
    %46 = vector.broadcast %cst_17 : f32 to vector<8x128xf32>
    %47 = arith.cmpf ogt, %45, %46 : vector<8x128xf32>
    %cst_18 = arith.constant 0.000000e+00 : f32
    %48 = vector.broadcast %cst_18 : f32 to vector<8x128xf32>
    %49 = arith.minimumf %45, %48 : vector<8x128xf32>
    %50 = math.exp %49 : vector<8x128xf32>
    %cst_19 = arith.constant 1.000000e+00 : f32
    %51 = vector.broadcast %cst_19 : f32 to vector<8x128xf32>
    %52 = arith.subf %50, %51 : vector<8x128xf32>
    %53 = arith.select %47, %45, %52 : vector<8x128xi1>, vector<8x128xf32>
    %54 = arith.truncf %53 : vector<8x128xf32> to vector<8x128xbf16>
    %55 = vector.extract_strided_slice %0 {offsets = [0, 512], sizes = [8, 128], strides = [1, 1]} : vector<8x640xbf16> to vector<8x128xbf16>
    %cst_20 = arith.constant dense<0.000000e+00> : vector<8x128xf32>
    %56 = tpu.matmul %55, %1, %cst_20 {dimension_numbers = #tpu.dot_dimension_numbers<[1], [0], [0], [1], [0, 0, 1, 1], [], []>} : vector<8x128xbf16>, vector<128x128xbf16>, vector<8x128xf32> -> vector<8x128xf32>
    %57 = vector.broadcast %2 : vector<1x128xf32> to vector<8x128xf32>
    %58 = arith.addf %56, %57 : vector<8x128xf32>
    %cst_21 = arith.constant 0.000000e+00 : f32
    %59 = vector.broadcast %cst_21 : f32 to vector<8x128xf32>
    %60 = arith.cmpf ogt, %58, %59 : vector<8x128xf32>
    %cst_22 = arith.constant 0.000000e+00 : f32
    %61 = vector.broadcast %cst_22 : f32 to vector<8x128xf32>
    %62 = arith.minimumf %58, %61 : vector<8x128xf32>
    %63 = math.exp %62 : vector<8x128xf32>
    %cst_23 = arith.constant 1.000000e+00 : f32
    %64 = vector.broadcast %cst_23 : f32 to vector<8x128xf32>
    %65 = arith.subf %63, %64 : vector<8x128xf32>
    %66 = arith.select %60, %58, %65 : vector<8x128xi1>, vector<8x128xf32>
    %67 = arith.truncf %66 : vector<8x128xf32> to vector<8x128xbf16>
    %68 = tpu.concatenate %15, %28, %41, %54, %67 in 1 : vector<8x128xbf16>, vector<8x128xbf16>, vector<8x128xbf16>, vector<8x128xbf16>, vector<8x128xbf16> -> vector<8x640xbf16>
    %c0_24 = arith.constant 0 : index
    %c0_25 = arith.constant 0 : index
    %69 = vector.load %arg5[%c0_24, %c0_25] : memref<640x160xbf16, #tpu.memory_space<vmem>>, vector<640x160xbf16>
    %cst_26 = arith.constant dense<0.000000e+00> : vector<8x160xf32>
    %70 = tpu.matmul %68, %69, %cst_26 {dimension_numbers = #tpu.dot_dimension_numbers<[1], [0], [0], [1], [0, 0, 1, 1], [], []>} : vector<8x640xbf16>, vector<640x160xbf16>, vector<8x160xf32> -> vector<8x160xf32>
    %c0_27 = arith.constant 0 : index
    %c0_28 = arith.constant 0 : index
    %71 = vector.load %arg6[%c0_27, %c0_28] : memref<1x160xf32, #tpu.memory_space<vmem>>, vector<1x160xf32>
    %72 = vector.broadcast %71 : vector<1x160xf32> to vector<8x160xf32>
    %73 = arith.addf %70, %72 : vector<8x160xf32>
    %cst_29 = arith.constant 0.000000e+00 : f32
    %74 = vector.broadcast %cst_29 : f32 to vector<8x160xf32>
    %75 = arith.cmpf ogt, %73, %74 : vector<8x160xf32>
    %cst_30 = arith.constant 0.000000e+00 : f32
    %76 = vector.broadcast %cst_30 : f32 to vector<8x160xf32>
    %77 = arith.minimumf %73, %76 : vector<8x160xf32>
    %78 = math.exp %77 : vector<8x160xf32>
    %cst_31 = arith.constant 1.000000e+00 : f32
    %79 = vector.broadcast %cst_31 : f32 to vector<8x160xf32>
    %80 = arith.subf %78, %79 : vector<8x160xf32>
    %81 = arith.select %75, %73, %80 : vector<8x160xi1>, vector<8x160xf32>
    %82 = arith.truncf %81 : vector<8x160xf32> to vector<8x160xbf16>
    %c0_32 = arith.constant 0 : index
    %c0_33 = arith.constant 0 : index
    %83 = vector.load %arg7[%c0_32, %c0_33] : memref<160x30xbf16, #tpu.memory_space<vmem>>, vector<160x30xbf16>
    %cst_34 = arith.constant dense<0.000000e+00> : vector<8x30xf32>
    %84 = tpu.matmul %82, %83, %cst_34 {dimension_numbers = #tpu.dot_dimension_numbers<[1], [0], [0], [1], [0, 0, 1, 1], [], []>} : vector<8x160xbf16>, vector<160x30xbf16>, vector<8x30xf32> -> vector<8x30xf32>
    %c0_35 = arith.constant 0 : index
    %c0_36 = arith.constant 0 : index
    %85 = vector.load %arg8[%c0_35, %c0_36] : memref<1x30xf32, #tpu.memory_space<vmem>>, vector<1x30xf32>
    %86 = vector.broadcast %85 : vector<1x30xf32> to vector<8x30xf32>
    %87 = arith.addf %84, %86 : vector<8x30xf32>
    %cst_37 = arith.constant 0.000000e+00 : f32
    %88 = vector.broadcast %cst_37 : f32 to vector<8x30xf32>
    %89 = arith.cmpf ogt, %87, %88 : vector<8x30xf32>
    %cst_38 = arith.constant 0.000000e+00 : f32
    %90 = vector.broadcast %cst_38 : f32 to vector<8x30xf32>
    %91 = arith.minimumf %87, %90 : vector<8x30xf32>
    %92 = math.exp %91 : vector<8x30xf32>
    %cst_39 = arith.constant 1.000000e+00 : f32
    %93 = vector.broadcast %cst_39 : f32 to vector<8x30xf32>
    %94 = arith.subf %92, %93 : vector<8x30xf32>
    %95 = arith.select %89, %87, %94 : vector<8x30xi1>, vector<8x30xf32>
    %96 = arith.truncf %95 : vector<8x30xf32> to vector<8x30xbf16>
    %c0_40 = arith.constant 0 : index
    %c0_41 = arith.constant 0 : index
    %97 = vector.load %arg9[%c0_40, %c0_41] : memref<30x16xbf16, #tpu.memory_space<vmem>>, vector<30x16xbf16>
    %cst_42 = arith.constant dense<0.000000e+00> : vector<8x16xf32>
    %98 = tpu.matmul %96, %97, %cst_42 {dimension_numbers = #tpu.dot_dimension_numbers<[1], [0], [0], [1], [0, 0, 1, 1], [], []>} : vector<8x30xbf16>, vector<30x16xbf16>, vector<8x16xf32> -> vector<8x16xf32>
    %c0_43 = arith.constant 0 : index
    %c0_44 = arith.constant 0 : index
    %99 = vector.load %arg10[%c0_43, %c0_44] : memref<1x16xf32, #tpu.memory_space<vmem>>, vector<1x16xf32>
    %100 = vector.broadcast %99 : vector<1x16xf32> to vector<8x16xf32>
    %101 = arith.addf %98, %100 : vector<8x16xf32>
    %102 = math.tanh %101 : vector<8x16xf32>
    %c0_45 = arith.constant 0 : index
    %c0_46 = arith.constant 0 : index
    %103 = vector.load %arg2[%c0_45, %c0_46] : memref<8x32xbf16, #tpu.memory_space<vmem>>, vector<8x32xbf16>
    %c0_47 = arith.constant 0 : index
    %c0_48 = arith.constant 0 : index
    %104 = vector.load %arg11[%c0_47, %c0_48] : memref<32x128xbf16, #tpu.memory_space<vmem>>, vector<32x128xbf16>
    %cst_49 = arith.constant dense<0.000000e+00> : vector<8x128xf32>
    %105 = tpu.matmul %103, %104, %cst_49 {dimension_numbers = #tpu.dot_dimension_numbers<[1], [0], [0], [1], [0, 0, 1, 1], [], []>} : vector<8x32xbf16>, vector<32x128xbf16>, vector<8x128xf32> -> vector<8x128xf32>
    %c0_50 = arith.constant 0 : index
    %c0_51 = arith.constant 0 : index
    %106 = vector.load %arg12[%c0_50, %c0_51] : memref<1x128xf32, #tpu.memory_space<vmem>>, vector<1x128xf32>
    %107 = vector.broadcast %106 : vector<1x128xf32> to vector<8x128xf32>
    %108 = arith.addf %105, %107 : vector<8x128xf32>
    %cst_52 = arith.constant 0.000000e+00 : f32
    %109 = vector.broadcast %cst_52 : f32 to vector<8x128xf32>
    %110 = arith.cmpf ogt, %108, %109 : vector<8x128xf32>
    %cst_53 = arith.constant 0.000000e+00 : f32
    %111 = vector.broadcast %cst_53 : f32 to vector<8x128xf32>
    %112 = arith.minimumf %108, %111 : vector<8x128xf32>
    %113 = math.exp %112 : vector<8x128xf32>
    %cst_54 = arith.constant 1.000000e+00 : f32
    %114 = vector.broadcast %cst_54 : f32 to vector<8x128xf32>
    %115 = arith.subf %113, %114 : vector<8x128xf32>
    %116 = arith.select %110, %108, %115 : vector<8x128xi1>, vector<8x128xf32>
    %117 = arith.truncf %116 : vector<8x128xf32> to vector<8x128xbf16>
    %c0_55 = arith.constant 0 : index
    %c0_56 = arith.constant 0 : index
    %118 = vector.load %arg13[%c0_55, %c0_56] : memref<128x64xbf16, #tpu.memory_space<vmem>>, vector<128x64xbf16>
    %cst_57 = arith.constant dense<0.000000e+00> : vector<8x64xf32>
    %119 = tpu.matmul %117, %118, %cst_57 {dimension_numbers = #tpu.dot_dimension_numbers<[1], [0], [0], [1], [0, 0, 1, 1], [], []>} : vector<8x128xbf16>, vector<128x64xbf16>, vector<8x64xf32> -> vector<8x64xf32>
    %c0_58 = arith.constant 0 : index
    %c0_59 = arith.constant 0 : index
    %120 = vector.load %arg14[%c0_58, %c0_59] : memref<1x64xf32, #tpu.memory_space<vmem>>, vector<1x64xf32>
    %121 = vector.broadcast %120 : vector<1x64xf32> to vector<8x64xf32>
    %122 = arith.addf %119, %121 : vector<8x64xf32>
    %cst_60 = arith.constant 0.000000e+00 : f32
    %123 = vector.broadcast %cst_60 : f32 to vector<8x64xf32>
    %124 = arith.cmpf ogt, %122, %123 : vector<8x64xf32>
    %cst_61 = arith.constant 0.000000e+00 : f32
    %125 = vector.broadcast %cst_61 : f32 to vector<8x64xf32>
    %126 = arith.minimumf %122, %125 : vector<8x64xf32>
    %127 = math.exp %126 : vector<8x64xf32>
    %cst_62 = arith.constant 1.000000e+00 : f32
    %128 = vector.broadcast %cst_62 : f32 to vector<8x64xf32>
    %129 = arith.subf %127, %128 : vector<8x64xf32>
    %130 = arith.select %124, %122, %129 : vector<8x64xi1>, vector<8x64xf32>
    %131 = arith.truncf %130 : vector<8x64xf32> to vector<8x64xbf16>
    %c0_63 = arith.constant 0 : index
    %c0_64 = arith.constant 0 : index
    %132 = vector.load %arg15[%c0_63, %c0_64] : memref<64x3xbf16, #tpu.memory_space<vmem>>, vector<64x3xbf16>
    %cst_65 = arith.constant dense<0.000000e+00> : vector<8x3xf32>
    %133 = tpu.matmul %131, %132, %cst_65 {dimension_numbers = #tpu.dot_dimension_numbers<[1], [0], [0], [1], [0, 0, 1, 1], [], []>} : vector<8x64xbf16>, vector<64x3xbf16>, vector<8x3xf32> -> vector<8x3xf32>
    %c0_66 = arith.constant 0 : index
    %c0_67 = arith.constant 0 : index
    %134 = vector.load %arg16[%c0_66, %c0_67] : memref<1x3xf32, #tpu.memory_space<vmem>>, vector<1x3xf32>
    %135 = vector.broadcast %134 : vector<1x3xf32> to vector<8x3xf32>
    %136 = arith.addf %133, %135 : vector<8x3xf32>
    %137 = tpu.concatenate %102, %136 in 1 : vector<8x16xf32>, vector<8x3xf32> -> vector<8x19xf32>
    %c0_68 = arith.constant 0 : index
    %c0_69 = arith.constant 0 : index
    %138 = vector.load %arg17[%c0_68, %c0_69] : memref<8x19xf32, #tpu.memory_space<vmem>>, vector<8x19xf32>
    tpu.vector_store %arg17[%c0_68, %c0_69], %137 {strides = array<i32>} : memref<8x19xf32, #tpu.memory_space<vmem>>, vector<8x19xf32>,
    return
  }
  func.func @transform_0(%arg0: i32) -> (i32, i32) {
    %c0_i32 = arith.constant 0 : i32
    %c0_i32_0 = arith.constant 0 : i32
    return %arg0, %c0_i32 : i32, i32
  }
  func.func @transform_1(%arg0: i32) -> (i32, i32) {
    %c0_i32 = arith.constant 0 : i32
    %c0_i32_0 = arith.constant 0 : i32
    return %arg0, %c0_i32 : i32, i32
  }
  func.func @transform_2(%arg0: i32) -> (i32, i32) {
    %c0_i32 = arith.constant 0 : i32
    %c0_i32_0 = arith.constant 0 : i32
    %c0_i32_1 = arith.constant 0 : i32
    return %c0_i32, %c0_i32_0 : i32, i32
  }
  func.func @transform_3(%arg0: i32) -> (i32, i32) {
    %c0_i32 = arith.constant 0 : i32
    %c0_i32_0 = arith.constant 0 : i32
    %c0_i32_1 = arith.constant 0 : i32
    return %c0_i32, %c0_i32_0 : i32, i32
  }
  func.func @transform_4(%arg0: i32) -> (i32, i32) {
    %c0_i32 = arith.constant 0 : i32
    %c0_i32_0 = arith.constant 0 : i32
    %c0_i32_1 = arith.constant 0 : i32
    return %c0_i32, %c0_i32_0 : i32, i32
  }
  func.func @transform_5(%arg0: i32) -> (i32, i32) {
    %c0_i32 = arith.constant 0 : i32
    %c0_i32_0 = arith.constant 0 : i32
    %c0_i32_1 = arith.constant 0 : i32
    return %c0_i32, %c0_i32_0 : i32, i32
  }
  func.func @transform_6(%arg0: i32) -> (i32, i32) {
    %c0_i32 = arith.constant 0 : i32
    %c0_i32_0 = arith.constant 0 : i32
    %c0_i32_1 = arith.constant 0 : i32
    return %c0_i32, %c0_i32_0 : i32, i32
  }
  func.func @transform_7(%arg0: i32) -> (i32, i32) {
    %c0_i32 = arith.constant 0 : i32
    %c0_i32_0 = arith.constant 0 : i32
    %c0_i32_1 = arith.constant 0 : i32
    return %c0_i32, %c0_i32_0 : i32, i32
  }
  func.func @transform_8(%arg0: i32) -> (i32, i32) {
    %c0_i32 = arith.constant 0 : i32
    %c0_i32_0 = arith.constant 0 : i32
    %c0_i32_1 = arith.constant 0 : i32
    return %c0_i32, %c0_i32_0 : i32, i32
  }
  func.func @transform_9(%arg0: i32) -> (i32, i32) {
    %c0_i32 = arith.constant 0 : i32
    %c0_i32_0 = arith.constant 0 : i32
    %c0_i32_1 = arith.constant 0 : i32
    return %c0_i32, %c0_i32_0 : i32, i32
  }
  func.func @transform_10(%arg0: i32) -> (i32, i32) {
    %c0_i32 = arith.constant 0 : i32
    %c0_i32_0 = arith.constant 0 : i32
    %c0_i32_1 = arith.constant 0 : i32
    return %c0_i32, %c0_i32_0 : i32, i32
  }
  func.func @transform_11(%arg0: i32) -> (i32, i32) {
    %c0_i32 = arith.constant 0 : i32
    %c0_i32_0 = arith.constant 0 : i32
    %c0_i32_1 = arith.constant 0 : i32
    return %c0_i32, %c0_i32_0 : i32, i32
  }
  func.func @transform_12(%arg0: i32) -> (i32, i32) {
    %c0_i32 = arith.constant 0 : i32
    %c0_i32_0 = arith.constant 0 : i32
    %c0_i32_1 = arith.constant 0 : i32
    return %c0_i32, %c0_i32_0 : i32, i32
  }
  func.func @transform_13(%arg0: i32) -> (i32, i32) {
    %c0_i32 = arith.constant 0 : i32
    %c0_i32_0 = arith.constant 0 : i32
    %c0_i32_1 = arith.constant 0 : i32
    return %c0_i32, %c0_i32_0 : i32, i32
  }
  func.func @transform_14(%arg0: i32) -> (i32, i32) {
    %c0_i32 = arith.constant 0 : i32
    %c0_i32_0 = arith.constant 0 : i32
    %c0_i32_1 = arith.constant 0 : i32
    return %c0_i32, %c0_i32_0 : i32, i32
  }
  func.func @transform_15(%arg0: i32) -> (i32, i32) {
    %c0_i32 = arith.constant 0 : i32
    %c0_i32_0 = arith.constant 0 : i32
    %c0_i32_1 = arith.constant 0 : i32
    return %c0_i32, %c0_i32_0 : i32, i32
  }
  func.func @transform_16(%arg0: i32) -> (i32, i32) {
    %c0_i32 = arith.constant 0 : i32
    %c0_i32_0 = arith.constant 0 : i32
    return %arg0, %c0_i32 : i32, i32
  }
}

</mosaic_0001>

<llo_original>
// kernel: tpu_custom_call.1
$region0: #{tpu_custom_call.1}
  #allocation0 [shape = 'u32[]', space=smem, size = 0x4, offset = 0x4, fixed_abs, tag = 'smem constant byte address 0x4 - core index']
  #allocation1 [shape = 'u32[144,128]{1,0:T(1,128)}', space=vmem, size = 0x12000, scoped, tag = 'internal scratch']
  %s0 = inlined_call_operand.vmem [shape: bf16[8,640], index: 0, kind: input, shape index: {}]
  %s1 = inlined_call_operand.vmem [shape: bf16[8,32], index: 1, kind: input, shape index: {}]
  %s2 = inlined_call_operand.vmem [shape: bf16[128,128], index: 2, kind: input, shape index: {}]
  %s3 = inlined_call_operand.vmem [shape: f32[1,128], index: 3, kind: input, shape index: {}]
  %s4 = inlined_call_operand.vmem [shape: bf16[640,160], index: 4, kind: input, shape index: {}]
  %s5 = inlined_call_operand.vmem [shape: f32[1,160], index: 5, kind: input, shape index: {}]
  %s6 = inlined_call_operand.vmem [shape: bf16[160,30], index: 6, kind: input, shape index: {}]
  %s7 = inlined_call_operand.vmem [shape: f32[1,30], index: 7, kind: input, shape index: {}]
  %s8 = inlined_call_operand.vmem [shape: bf16[30,16], index: 8, kind: input, shape index: {}]
  %s9 = inlined_call_operand.vmem [shape: f32[1,16], index: 9, kind: input, shape index: {}]
  %s10 = inlined_call_operand.vmem [shape: bf16[32,128], index: 10, kind: input, shape index: {}]
  %s11 = inlined_call_operand.vmem [shape: f32[1,128], index: 11, kind: input, shape index: {}]
  %s12 = inlined_call_operand.vmem [shape: bf16[128,64], index: 12, kind: input, shape index: {}]
  %s13 = inlined_call_operand.vmem [shape: f32[1,64], index: 13, kind: input, shape index: {}]
  %s14 = inlined_call_operand.vmem [shape: bf16[64,3], index: 14, kind: input, shape index: {}]
  %s15 = inlined_call_operand.vmem [shape: f32[1,3], index: 15, kind: input, shape index: {}]
  %s16 = inlined_call_operand.hbm [shape: f32[8,19], index: 16, kind: output, shape index: {}]
  %s17 = sld [smem:[#allocation0]]
  $region74: #{tpu_custom_call.1} parent=0
    _
  %s19 = ssub.s32 1, %s17
  %s20 = scalar_select 0, %s19, %s17
  $region1: #{tpu_custom_call.1} parent=0
    #allocation2 [shape = 'u8[4096]{0}', space=vmem, size = 0x1000, scoped, tag = 'output window, operand 0, single buffered']
    #allocation3 [shape = 's32[1]{0}', space=sflag, size = 0x4, scoped, tag = 'scoped memory for tpu_custom_call.1']
    %21 = vsyncpa [#allocation3], 0
    // Predicated region
    $region2: #{tpu_custom_call.1} parent=1 // pred_check
      _
    $region3: #{tpu_custom_call.1} parent=1 // pred_check_branch
      %23 = sbr.rel (0) target = $region5
    $region4: #{tpu_custom_call.1} parent=1 // pred_region
      _
    $region5: #{tpu_custom_call.1} parent=1 // pred_fallthru
      _
    // Predicated region
    $region6: #{tpu_custom_call.1} parent=1 // pred_check
      _
    $region7: #{tpu_custom_call.1} parent=1 // pred_check_branch
      %25 = sbr.rel (0) target = $region9
    $region8: #{tpu_custom_call.1} parent=1 // pred_region
      _
    $region9: #{tpu_custom_call.1} parent=1 // pred_fallthru
      _
    // Predicated region
    $region10: #{tpu_custom_call.1} parent=1 // pred_check
      _
    $region11: #{tpu_custom_call.1} parent=1 // pred_check_branch
      %27 = sbr.rel (0) target = $region13
    $region12: #{tpu_custom_call.1} parent=1 // pred_region
      _
    $region13: #{tpu_custom_call.1} parent=1 // pred_fallthru
      _
    // Predicated region
    $region14: #{tpu_custom_call.1} parent=1 // pred_check
      _
    $region15: #{tpu_custom_call.1} parent=1 // pred_check_branch
      %29 = sbr.rel (0) target = $region17
    $region16: #{tpu_custom_call.1} parent=1 // pred_region
      _
    $region17: #{tpu_custom_call.1} parent=1 // pred_fallthru
      _
    // Predicated region
    $region18: #{tpu_custom_call.1} parent=1 // pred_check
      _
    $region19: #{tpu_custom_call.1} parent=1 // pred_check_branch
      %31 = sbr.rel (0) target = $region21
    $region20: #{tpu_custom_call.1} parent=1 // pred_region
      _
    $region21: #{tpu_custom_call.1} parent=1 // pred_fallthru
      _
    // Predicated region
    $region22: #{tpu_custom_call.1} parent=1 // pred_check
      _
    $region23: #{tpu_custom_call.1} parent=1 // pred_check_branch
      %33 = sbr.rel (0) target = $region25
    $region24: #{tpu_custom_call.1} parent=1 // pred_region
      _
    $region25: #{tpu_custom_call.1} parent=1 // pred_fallthru
      _
    // Predicated region
    $region26: #{tpu_custom_call.1} parent=1 // pred_check
      _
    $region27: #{tpu_custom_call.1} parent=1 // pred_check_branch
      %35 = sbr.rel (0) target = $region29
    $region28: #{tpu_custom_call.1} parent=1 // pred_region
      _
    $region29: #{tpu_custom_call.1} parent=1 // pred_fallthru
      _
    // Predicated region
    $region30: #{tpu_custom_call.1} parent=1 // pred_check
      _
    $region31: #{tpu_custom_call.1} parent=1 // pred_check_branch
      %37 = sbr.rel (0) target = $region33
    $region32: #{tpu_custom_call.1} parent=1 // pred_region
      _
    $region33: #{tpu_custom_call.1} parent=1 // pred_fallthru
      _
    // Predicated region
    $region34: #{tpu_custom_call.1} parent=1 // pred_check
      _
    $region35: #{tpu_custom_call.1} parent=1 // pred_check_branch
      %39 = sbr.rel (0) target = $region37
    $region36: #{tpu_custom_call.1} parent=1 // pred_region
      _
    $region37: #{tpu_custom_call.1} parent=1 // pred_fallthru
      _
    // Predicated region
    $region38: #{tpu_custom_call.1} parent=1 // pred_check
      _
    $region39: #{tpu_custom_call.1} parent=1 // pred_check_branch
      %41 = sbr.rel (0) target = $region41
    $region40: #{tpu_custom_call.1} parent=1 // pred_region
      _
    $region41: #{tpu_custom_call.1} parent=1 // pred_fallthru
      _
    // Predicated region
    $region42: #{tpu_custom_call.1} parent=1 // pred_check
      _
    $region43: #{tpu_custom_call.1} parent=1 // pred_check_branch
      %43 = sbr.rel (0) target = $region45
    $region44: #{tpu_custom_call.1} parent=1 // pred_region
      _
    $region45: #{tpu_custom_call.1} parent=1 // pred_fallthru
      _
    // Predicated region
    $region46: #{tpu_custom_call.1} parent=1 // pred_check
      _
    $region47: #{tpu_custom_call.1} parent=1 // pred_check_branch
      %45 = sbr.rel (0) target = $region49
    $region48: #{tpu_custom_call.1} parent=1 // pred_region
      _
    $region49: #{tpu_custom_call.1} parent=1 // pred_fallthru
      _
    // Predicated region
    $region50: #{tpu_custom_call.1} parent=1 // pred_check
      _
    $region51: #{tpu_custom_call.1} parent=1 // pred_check_branch
      %47 = sbr.rel (0) target = $region53
    $region52: #{tpu_custom_call.1} parent=1 // pred_region
      _
    $region53: #{tpu_custom_call.1} parent=1 // pred_fallthru
      _
    // Predicated region
    $region54: #{tpu_custom_call.1} parent=1 // pred_check
      _
    $region55: #{tpu_custom_call.1} parent=1 // pred_check_branch
      %49 = sbr.rel (0) target = $region57
    $region56: #{tpu_custom_call.1} parent=1 // pred_region
      _
    $region57: #{tpu_custom_call.1} parent=1 // pred_fallthru
      _
    // Predicated region
    $region58: #{tpu_custom_call.1} parent=1 // pred_check
      _
    $region59: #{tpu_custom_call.1} parent=1 // pred_check_branch
      %51 = sbr.rel (0) target = $region61
    $region60: #{tpu_custom_call.1} parent=1 // pred_region
      _
    $region61: #{tpu_custom_call.1} parent=1 // pred_fallthru
      _
    // Predicated region
    $region62: #{tpu_custom_call.1} parent=1 // pred_check
      _
    $region63: #{tpu_custom_call.1} parent=1 // pred_check_branch
      %53 = sbr.rel (0) target = $region65
    $region64: #{tpu_custom_call.1} parent=1 // pred_region
      _
    $region65: #{tpu_custom_call.1} parent=1 // pred_fallthru
      _
    %v55 = vld [vmem:[%s0] sm:$0xff]
    %v56 = vld [vmem:[%s0 + $0x8] sm:$0xff]
    %v57 = vld [vmem:[%s0 + $0x10] sm:$0xf]
    %v58 = vld [vmem:[%s2] sm:$0xf]
    %v59 = vld [vmem:[%s2 + $0x4] sm:$0xf]
    %v60 = vld [vmem:[%s2 + $0x8] sm:$0xf]
    %v61 = vld [vmem:[%s2 + $0xc] sm:$0xf]
    %v62 = vld [vmem:[%s2 + $0x10] sm:$0xf]
    %v63 = vld [vmem:[%s2 + $0x14] sm:$0xf]
    %v64 = vld [vmem:[%s2 + $0x18] sm:$0xf]
    %v65 = vld [vmem:[%s2 + $0x1c] sm:$0xf]
    %v66 = vld [vmem:[%s2 + $0x20] sm:$0xf]
    %v67 = vld [vmem:[%s2 + $0x24] sm:$0xf]
    %v68 = vld [vmem:[%s2 + $0x28] sm:$0xf]
    %v69 = vld [vmem:[%s2 + $0x2c] sm:$0xf]
    %v70 = vld [vmem:[%s2 + $0x30] sm:$0xf]
    %v71 = vld [vmem:[%s2 + $0x34] sm:$0xf]
    %v72 = vld [vmem:[%s2 + $0x38] sm:$0xf]
    %v73 = vld [vmem:[%s2 + $0x3c] sm:$0xf]
    %v74 = vld [vmem:[%s3] sm:$0x1]
    %v76 = vlaneseq
    %v77 = vshrl.u32 %v76, 7
    %v78 = vsub.s32 0, %v77
    %v79 = vrot.slane %v74, %v78
    %v97 = vunpack.c.l.b16 %v58
    %v98 = vunpack.c.l.b16 %v59
    %v99 = vunpack.c.l.b16 %v60
    %v100 = vunpack.c.l.b16 %v61
    %v101 = vunpack.c.l.b16 %v62
    %v102 = vunpack.c.l.b16 %v63
    %v103 = vunpack.c.l.b16 %v64
    %v104 = vunpack.c.l.b16 %v65
    %v105 = vunpack.c.l.b16 %v66
    %v106 = vunpack.c.l.b16 %v67
    %v107 = vunpack.c.l.b16 %v68
    %v108 = vunpack.c.l.b16 %v69
    %v109 = vunpack.c.l.b16 %v70
    %v110 = vunpack.c.l.b16 %v71
    %v111 = vunpack.c.l.b16 %v72
    %v112 = vunpack.c.l.b16 %v73
    %v113 = vpack.c.b16 %v98, %v97
    %v114 = vpack.c.b16 %v100, %v99
    %v115 = vpack.c.b16 %v102, %v101
    %v116 = vpack.c.b16 %v104, %v103
    %v117 = vpack.c.b16 %v106, %v105
    %v118 = vpack.c.b16 %v108, %v107
    %v119 = vpack.c.b16 %v110, %v109
    %v120 = vpack.c.b16 %v112, %v111
    %129 = vmatprep.subr.bf16.mxu0 0
    %130 = vmatpush1.bf16.msra.mxu0 %v120
    %131 = vmatprep.subr.bf16.mxu0 0
    %132 = vmatpush1.bf16.msra.mxu0 %v119
    %133 = vmatprep.subr.bf16.mxu0 0
    %134 = vmatpush1.bf16.msra.mxu0 %v118
    %135 = vmatprep.subr.bf16.mxu0 0
    %136 = vmatpush1.bf16.msra.mxu0 %v117
    %137 = vmatprep.subr.bf16.mxu0 0
    %138 = vmatpush1.bf16.msra.mxu0 %v116
    %139 = vmatprep.subr.bf16.mxu0 0
    %140 = vmatpush1.bf16.msra.mxu0 %v115
    %141 = vmatprep.subr.bf16.mxu0 0
    %142 = vmatpush1.bf16.msra.mxu0 %v114
    %143 = vmatprep.subr.bf16.mxu0 0
    %144 = vmatpush1.bf16.msra.mxu0 %v113
    %145 = vmatprep.subr.bf16.mxu0 0
    %146 = vmatpush2.bf16.msra.mxu0 0
    %147 = vmatprep.subr.bf16.mxu0 0
    %148 = vmatpush2.bf16.msra.mxu0 0
    %149 = vmatprep.subr.bf16.mxu0 0
    %150 = vmatpush2.bf16.msra.mxu0 0
    %151 = vmatprep.subr.bf16.mxu0 0
    %152 = vmatpush2.bf16.msra.mxu0 0
    %153 = vmatprep.subr.bf16.mxu0 0
    %154 = vmatpush2.bf16.msra.mxu0 0
    %155 = vmatprep.subr.bf16.mxu0 0
    %156 = vmatpush2.bf16.msra.mxu0 0
    %157 = vmatprep.subr.bf16.mxu0 0
    %158 = vmatpush2.bf16.msra.mxu0 0
    %159 = vmatprep.subr.bf16.mxu0 0
    %160 = vmatpush2.bf16.msra.mxu0 0
    %161 = vmatprep.mubr.bf16.mxu0 0
    %162 = vmatmul.mubr.bf16.gmra.mxu0 %v55
    %v163 = vpop.f32.mrf.mxu0
    %v164 = vadd.f32 %v79, %v163
    %v165 = vpop.f32.mrf.mxu0
    %v166 = vpop.f32.mrf.mxu0
    %v167 = vpop.f32.mrf.mxu0
    %168 = vdwg.mxu0
    %vm169 = vcmp.gt.f32.partialorder %v164, 0.0
    %v170 = vmin.f32 %v164, 0.0
    %v171 = vmul.f32 %v170, 1.442695
    %v172 = vpow.pop %v171
    %v173 = vsub.f32 %v172, 1.0
    %v174 = vsel %vm169, %v164, %v173
    %v175 = vpack.c.bf16 %v174, %v174
    %v177 = vunpack.c.h.b16 %v55
    %v178 = vpack.c.b16 %v177, %v177
    %180 = vmatprep.subr.bf16.mxu0 0
    %181 = vmatpush1.bf16.msra.mxu0 %v120
    %182 = vmatprep.subr.bf16.mxu0 0
    %183 = vmatpush1.bf16.msra.mxu0 %v119
    %184 = vmatprep.subr.bf16.mxu0 0
    %185 = vmatpush1.bf16.msra.mxu0 %v118
    %186 = vmatprep.subr.bf16.mxu0 0
    %187 = vmatpush1.bf16.msra.mxu0 %v117
    %188 = vmatprep.subr.bf16.mxu0 0
    %189 = vmatpush1.bf16.msra.mxu0 %v116
    %190 = vmatprep.subr.bf16.mxu0 0
    %191 = vmatpush1.bf16.msra.mxu0 %v115
    %192 = vmatprep.subr.bf16.mxu0 0
    %193 = vmatpush1.bf16.msra.mxu0 %v114
    %194 = vmatprep.subr.bf16.mxu0 0
    %195 = vmatpush1.bf16.msra.mxu0 %v113
    %196 = vmatprep.subr.bf16.mxu0 0
    %197 = vmatpush2.bf16.msra.mxu0 0
    %198 = vmatprep.subr.bf16.mxu0 0
    %199 = vmatpush2.bf16.msra.mxu0 0
    %200 = vmatprep.subr.bf16.mxu0 0
    %201 = vmatpush2.bf16.msra.mxu0 0
    %202 = vmatprep.subr.bf16.mxu0 0
    %203 = vmatpush2.bf16.msra.mxu0 0
    %204 = vmatprep.subr.bf16.mxu0 0
    %205 = vmatpush2.bf16.msra.mxu0 0
    %206 = vmatprep.subr.bf16.mxu0 0
    %207 = vmatpush2.bf16.msra.mxu0 0
    %208 = vmatprep.subr.bf16.mxu0 0
    %209 = vmatpush2.bf16.msra.mxu0 0
    %210 = vmatprep.subr.bf16.mxu0 0
    %211 = vmatpush2.bf16.msra.mxu0 0
    %212 = vmatprep.mubr.bf16.mxu0 0
    %213 = vmatmul.mubr.bf16.gmra.mxu0 %v178
    %v214 = vpop.f32.mrf.mxu0
    %v215 = vadd.f32 %v79, %v214
    %v216 = vpop.f32.mrf.mxu0
    %v217 = vpop.f32.mrf.mxu0
    %v218 = vpop.f32.mrf.mxu0
    %219 = vdwg.mxu0
    %vm220 = vcmp.gt.f32.partialorder %v215, 0.0
    %v221 = vmin.f32 %v215, 0.0
    %v222 = vmul.f32 %v221, 1.442695
    %v223 = vpow.pop %v222
    %v224 = vsub.f32 %v223, 1.0
    %v225 = vsel %vm220, %v215, %v224
    %v226 = vpack.c.bf16 %v225, %v225
    %227 = vmatprep.subr.bf16.mxu0 0
    %228 = vmatpush1.bf16.msra.mxu0 %v120
    %229 = vmatprep.subr.bf16.mxu0 0
    %230 = vmatpush1.bf16.msra.mxu0 %v119
    %231 = vmatprep.subr.bf16.mxu0 0
    %232 = vmatpush1.bf16.msra.mxu0 %v118
    %233 = vmatprep.subr.bf16.mxu0 0
    %234 = vmatpush1.bf16.msra.mxu0 %v117
    %235 = vmatprep.subr.bf16.mxu0 0
    %236 = vmatpush1.bf16.msra.mxu0 %v116
    %237 = vmatprep.subr.bf16.mxu0 0
    %238 = vmatpush1.bf16.msra.mxu0 %v115
    %239 = vmatprep.subr.bf16.mxu0 0
    %240 = vmatpush1.bf16.msra.mxu0 %v114
    %241 = vmatprep.subr.bf16.mxu0 0
    %242 = vmatpush1.bf16.msra.mxu0 %v113
    %243 = vmatprep.subr.bf16.mxu0 0
    %244 = vmatpush2.bf16.msra.mxu0 0
    %245 = vmatprep.subr.bf16.mxu0 0
    %246 = vmatpush2.bf16.msra.mxu0 0
    %247 = vmatprep.subr.bf16.mxu0 0
    %248 = vmatpush2.bf16.msra.mxu0 0
    %249 = vmatprep.subr.bf16.mxu0 0
    %250 = vmatpush2.bf16.msra.mxu0 0
    %251 = vmatprep.subr.bf16.mxu0 0
    %252 = vmatpush2.bf16.msra.mxu0 0
    %253 = vmatprep.subr.bf16.mxu0 0
    %254 = vmatpush2.bf16.msra.mxu0 0
    %255 = vmatprep.subr.bf16.mxu0 0
    %256 = vmatpush2.bf16.msra.mxu0 0
    %257 = vmatprep.subr.bf16.mxu0 0
    %258 = vmatpush2.bf16.msra.mxu0 0
    %259 = vmatprep.mubr.bf16.mxu0 0
    %260 = vmatmul.mubr.bf16.gmra.mxu0 %v56
    %v261 = vpop.f32.mrf.mxu0
    %v262 = vadd.f32 %v79, %v261
    %v263 = vpop.f32.mrf.mxu0
    %v264 = vpop.f32.mrf.mxu0
    %v265 = vpop.f32.mrf.mxu0
    %266 = vdwg.mxu0
    %vm267 = vcmp.gt.f32.partialorder %v262, 0.0
    %v268 = vmin.f32 %v262, 0.0
    %v269 = vmul.f32 %v268, 1.442695
    %v270 = vpow.pop %v269
    %v271 = vsub.f32 %v270, 1.0
    %v272 = vsel %vm267, %v262, %v271
    %v273 = vpack.c.bf16 %v272, %v272
    %v275 = vunpack.c.h.b16 %v56
    %v276 = vpack.c.b16 %v275, %v275
    %278 = vmatprep.subr.bf16.mxu0 0
    %279 = vmatpush1.bf16.msra.mxu0 %v120
    %280 = vmatprep.subr.bf16.mxu0 0
    %281 = vmatpush1.bf16.msra.mxu0 %v119
    %282 = vmatprep.subr.bf16.mxu0 0
    %283 = vmatpush1.bf16.msra.mxu0 %v118
    %284 = vmatprep.subr.bf16.mxu0 0
    %285 = vmatpush1.bf16.msra.mxu0 %v117
    %286 = vmatprep.subr.bf16.mxu0 0
    %287 = vmatpush1.bf16.msra.mxu0 %v116
    %288 = vmatprep.subr.bf16.mxu0 0
    %289 = vmatpush1.bf16.msra.mxu0 %v115
    %290 = vmatprep.subr.bf16.mxu0 0
    %291 = vmatpush1.bf16.msra.mxu0 %v114
    %292 = vmatprep.subr.bf16.mxu0 0
    %293 = vmatpush1.bf16.msra.mxu0 %v113
    %294 = vmatprep.subr.bf16.mxu0 0
    %295 = vmatpush2.bf16.msra.mxu0 0
    %296 = vmatprep.subr.bf16.mxu0 0
    %297 = vmatpush2.bf16.msra.mxu0 0
    %298 = vmatprep.subr.bf16.mxu0 0
    %299 = vmatpush2.bf16.msra.mxu0 0
    %300 = vmatprep.subr.bf16.mxu0 0
    %301 = vmatpush2.bf16.msra.mxu0 0
    %302 = vmatprep.subr.bf16.mxu0 0
    %303 = vmatpush2.bf16.msra.mxu0 0
    %304 = vmatprep.subr.bf16.mxu0 0
    %305 = vmatpush2.bf16.msra.mxu0 0
    %306 = vmatprep.subr.bf16.mxu0 0
    %307 = vmatpush2.bf16.msra.mxu0 0
    %308 = vmatprep.subr.bf16.mxu0 0
    %309 = vmatpush2.bf16.msra.mxu0 0
    %310 = vmatprep.mubr.bf16.mxu0 0
    %311 = vmatmul.mubr.bf16.gmra.mxu0 %v276
    %v312 = vpop.f32.mrf.mxu0
    %v313 = vadd.f32 %v79, %v312
    %v314 = vpop.f32.mrf.mxu0
    %v315 = vpop.f32.mrf.mxu0
    %v316 = vpop.f32.mrf.mxu0
    %317 = vdwg.mxu0
    %vm318 = vcmp.gt.f32.partialorder %v313, 0.0
    %v319 = vmin.f32 %v313, 0.0
    %v320 = vmul.f32 %v319, 1.442695
    %v321 = vpow.pop %v320
    %v322 = vsub.f32 %v321, 1.0
    %v323 = vsel %vm318, %v313, %v322
    %v324 = vpack.c.bf16 %v323, %v323
    %325 = vmatprep.subr.bf16.mxu0 0
    %326 = vmatpush1.bf16.msra.mxu0 %v120
    %327 = vmatprep.subr.bf16.mxu0 0
    %328 = vmatpush1.bf16.msra.mxu0 %v119
    %329 = vmatprep.subr.bf16.mxu0 0
    %330 = vmatpush1.bf16.msra.mxu0 %v118
    %331 = vmatprep.subr.bf16.mxu0 0
    %332 = vmatpush1.bf16.msra.mxu0 %v117
    %333 = vmatprep.subr.bf16.mxu0 0
    %334 = vmatpush1.bf16.msra.mxu0 %v116
    %335 = vmatprep.subr.bf16.mxu0 0
    %336 = vmatpush1.bf16.msra.mxu0 %v115
    %337 = vmatprep.subr.bf16.mxu0 0
    %338 = vmatpush1.bf16.msra.mxu0 %v114
    %339 = vmatprep.subr.bf16.mxu0 0
    %340 = vmatpush1.bf16.msra.mxu0 %v113
    %341 = vmatprep.subr.bf16.mxu0 0
    %342 = vmatpush2.bf16.msra.mxu0 0
    %343 = vmatprep.subr.bf16.mxu0 0
    %344 = vmatpush2.bf16.msra.mxu0 0
    %345 = vmatprep.subr.bf16.mxu0 0
    %346 = vmatpush2.bf16.msra.mxu0 0
    %347 = vmatprep.subr.bf16.mxu0 0
    %348 = vmatpush2.bf16.msra.mxu0 0
    %349 = vmatprep.subr.bf16.mxu0 0
    %350 = vmatpush2.bf16.msra.mxu0 0
    %351 = vmatprep.subr.bf16.mxu0 0
    %352 = vmatpush2.bf16.msra.mxu0 0
    %353 = vmatprep.subr.bf16.mxu0 0
    %354 = vmatpush2.bf16.msra.mxu0 0
    %355 = vmatprep.subr.bf16.mxu0 0
    %356 = vmatpush2.bf16.msra.mxu0 0
    %357 = vmatprep.mubr.bf16.mxu0 0
    %358 = vmatmul.mubr.bf16.gmra.mxu0 %v57
    %v359 = vpop.f32.mrf.mxu0
    %v360 = vadd.f32 %v79, %v359
    %v361 = vpop.f32.mrf.mxu0
    %v362 = vpop.f32.mrf.mxu0
    %v363 = vpop.f32.mrf.mxu0
    %364 = vdwg.mxu0
    %vm365 = vcmp.gt.f32.partialorder %v360, 0.0
    %v366 = vmin.f32 %v360, 0.0
    %v367 = vmul.f32 %v366, 1.442695
    %v368 = vpow.pop %v367
    %v369 = vsub.f32 %v368, 1.0
    %v370 = vsel %vm365, %v360, %v369
    %v371 = vpack.c.bf16 %v370, %v370
    %v372 = vld [vmem:[%s4] sm:$0xff]
    %v373 = vld [vmem:[%s4 + $0x8] sm:$0xff]
    %v374 = vld [vmem:[%s4 + $0x10] sm:$0xff]
    %v375 = vld [vmem:[%s4 + $0x18] sm:$0xff]
    %v376 = vld [vmem:[%s4 + $0x20] sm:$0xff]
    %v377 = vld [vmem:[%s4 + $0x28] sm:$0xff]
    %v378 = vld [vmem:[%s4 + $0x30] sm:$0xff]
    %v379 = vld [vmem:[%s4 + $0x38] sm:$0xff]
    %v380 = vld [vmem:[%s4 + $0x40] sm:$0xff]
    %v381 = vld [vmem:[%s4 + $0x48] sm:$0xff]
    %v382 = vld [vmem:[%s4 + $0x50] sm:$0xff]
    %v383 = vld [vmem:[%s4 + $0x58] sm:$0xff]
    %v384 = vld [vmem:[%s4 + $0x60] sm:$0xff]
    %v385 = vld [vmem:[%s4 + $0x68] sm:$0xff]
    %v386 = vld [vmem:[%s4 + $0x70] sm:$0xff]
    %v387 = vld [vmem:[%s4 + $0x78] sm:$0xff]
    %v388 = vld [vmem:[%s4 + $0x80] sm:$0xff]
    %v389 = vld [vmem:[%s4 + $0x88] sm:$0xff]
    %v390 = vld [vmem:[%s4 + $0x90] sm:$0xff]
    %v391 = vld [vmem:[%s4 + $0x98] sm:$0xff]
    %v392 = vld [vmem:[%s4 + $0xa0] sm:$0xff]
    %v393 = vld [vmem:[%s4 + $0xa8] sm:$0xff]
    %v394 = vld [vmem:[%s4 + $0xb0] sm:$0xff]
    %v395 = vld [vmem:[%s4 + $0xb8] sm:$0xff]
    %v396 = vld [vmem:[%s4 + $0xc0] sm:$0xff]
    %v397 = vld [vmem:[%s4 + $0xc8] sm:$0xff]
    %v398 = vld [vmem:[%s4 + $0xd0] sm:$0xff]
    %v399 = vld [vmem:[%s4 + $0xd8] sm:$0xff]
    %v400 = vld [vmem:[%s4 + $0xe0] sm:$0xff]
    %v401 = vld [vmem:[%s4 + $0xe8] sm:$0xff]
    %v402 = vld [vmem:[%s4 + $0xf0] sm:$0xff]
    %v403 = vld [vmem:[%s4 + $0xf8] sm:$0xff]
    %v404 = vld [vmem:[%s4 + $0x100] sm:$0xff]
    %v405 = vld [vmem:[%s4 + $0x108] sm:$0xff]
    %v406 = vld [vmem:[%s4 + $0x110] sm:$0xff]
    %v407 = vld [vmem:[%s4 + $0x118] sm:$0xff]
    %v408 = vld [vmem:[%s4 + $0x120] sm:$0xff]
    %v409 = vld [vmem:[%s4 + $0x128] sm:$0xff]
    %v410 = vld [vmem:[%s4 + $0x130] sm:$0xff]
    %v411 = vld [vmem:[%s4 + $0x138] sm:$0xff]
    %v412 = vld [vmem:[%s4 + $0x140] sm:$0xff]
    %v413 = vld [vmem:[%s4 + $0x148] sm:$0xff]
    %v414 = vld [vmem:[%s4 + $0x150] sm:$0xff]
    %v415 = vld [vmem:[%s4 + $0x158] sm:$0xff]
    %v416 = vld [vmem:[%s4 + $0x160] sm:$0xff]
    %v417 = vld [vmem:[%s4 + $0x168] sm:$0xff]
    %v418 = vld [vmem:[%s4 + $0x170] sm:$0xff]
    %v419 = vld [vmem:[%s4 + $0x178] sm:$0xff]
    %v420 = vld [vmem:[%s4 + $0x180] sm:$0xff]
    %v421 = vld [vmem:[%s4 + $0x188] sm:$0xff]
    %v422 = vld [vmem:[%s4 + $0x190] sm:$0xff]
    %v423 = vld [vmem:[%s4 + $0x198] sm:$0xff]
    %v424 = vld [vmem:[%s4 + $0x1a0] sm:$0xff]
    %v425 = vld [vmem:[%s4 + $0x1a8] sm:$0xff]
    %v426 = vld [vmem:[%s4 + $0x1b0] sm:$0xff]
    %v427 = vld [vmem:[%s4 + $0x1b8] sm:$0xff]
    %v428 = vld [vmem:[%s4 + $0x1c0] sm:$0xff]
    %v429 = vld [vmem:[%s4 + $0x1c8] sm:$0xff]
    %v430 = vld [vmem:[%s4 + $0x1d0] sm:$0xff]
    %v431 = vld [vmem:[%s4 + $0x1d8] sm:$0xff]
    %v432 = vld [vmem:[%s4 + $0x1e0] sm:$0xff]
    %v433 = vld [vmem:[%s4 + $0x1e8] sm:$0xff]
    %v434 = vld [vmem:[%s4 + $0x1f0] sm:$0xff]
    %v435 = vld [vmem:[%s4 + $0x1f8] sm:$0xff]
    %v436 = vld [vmem:[%s4 + $0x200] sm:$0xff]
    %v437 = vld [vmem:[%s4 + $0x208] sm:$0xff]
    %v438 = vld [vmem:[%s4 + $0x210] sm:$0xff]
    %v439 = vld [vmem:[%s4 + $0x218] sm:$0xff]
    %v440 = vld [vmem:[%s4 + $0x220] sm:$0xff]
    %v441 = vld [vmem:[%s4 + $0x228] sm:$0xff]
    %v442 = vld [vmem:[%s4 + $0x230] sm:$0xff]
    %v443 = vld [vmem:[%s4 + $0x238] sm:$0xff]
    %v444 = vld [vmem:[%s4 + $0x240] sm:$0xff]
    %v445 = vld [vmem:[%s4 + $0x248] sm:$0xff]
    %v446 = vld [vmem:[%s4 + $0x250] sm:$0xff]
    %v447 = vld [vmem:[%s4 + $0x258] sm:$0xff]
    %v448 = vld [vmem:[%s4 + $0x260] sm:$0xff]
    %v449 = vld [vmem:[%s4 + $0x268] sm:$0xff]
    %v450 = vld [vmem:[%s4 + $0x270] sm:$0xff]
    %v451 = vld [vmem:[%s4 + $0x278] sm:$0xff]
    %v452 = vld [vmem:[%s5] sm:$0x3]
    %v454 = vlaneseq
    %v455 = vshrl.u32 %v454, 7
    %v456 = vsub.s32 0, %v455
    %v457 = vrot.slane %v452, %v456
    %v458 = vlaneseq
    %v459 = vshrl.u32 %v458, 7
    %v460 = vsub.s32 1, %v459
    %v461 = vrot.slane %v452, %v460
    %v544 = vunpack.c.l.b16 %v372
    %v545 = vunpack.c.h.b16 %v372
    %v546 = vunpack.c.l.b16 %v373
    %v547 = vunpack.c.h.b16 %v373
    %v548 = vunpack.c.l.b16 %v374
    %v549 = vunpack.c.h.b16 %v374
    %v550 = vunpack.c.l.b16 %v375
    %v551 = vunpack.c.h.b16 %v375
    %v552 = vunpack.c.l.b16 %v376
    %v553 = vunpack.c.h.b16 %v376
    %v554 = vunpack.c.l.b16 %v377
    %v555 = vunpack.c.h.b16 %v377
    %v556 = vunpack.c.l.b16 %v378
    %v557 = vunpack.c.h.b16 %v378
    %v558 = vunpack.c.l.b16 %v379
    %v559 = vunpack.c.h.b16 %v379
    %v560 = vunpack.c.l.b16 %v380
    %v561 = vunpack.c.h.b16 %v380
    %v562 = vunpack.c.l.b16 %v381
    %v563 = vunpack.c.h.b16 %v381
    %v564 = vunpack.c.l.b16 %v382
    %v565 = vunpack.c.h.b16 %v382
    %v566 = vunpack.c.l.b16 %v383
    %v567 = vunpack.c.h.b16 %v383
    %v568 = vunpack.c.l.b16 %v384
    %v569 = vunpack.c.h.b16 %v384
    %v570 = vunpack.c.l.b16 %v385
    %v571 = vunpack.c.h.b16 %v385
    %v572 = vunpack.c.l.b16 %v386
    %v573 = vunpack.c.h.b16 %v386
    %v574 = vunpack.c.l.b16 %v387
    %v575 = vunpack.c.h.b16 %v387
    %v576 = vunpack.c.l.b16 %v388
    %v577 = vunpack.c.h.b16 %v388
    %v578 = vunpack.c.l.b16 %v389
    %v579 = vunpack.c.h.b16 %v389
    %v580 = vunpack.c.l.b16 %v390
    %v581 = vunpack.c.h.b16 %v390
    %v582 = vunpack.c.l.b16 %v391
    %v583 = vunpack.c.h.b16 %v391
    %v584 = vunpack.c.l.b16 %v392
    %v585 = vunpack.c.h.b16 %v392
    %v586 = vunpack.c.l.b16 %v393
    %v587 = vunpack.c.h.b16 %v393
    %v588 = vunpack.c.l.b16 %v394
    %v589 = vunpack.c.h.b16 %v394
    %v590 = vunpack.c.l.b16 %v395
    %v591 = vunpack.c.h.b16 %v395
    %v592 = vunpack.c.l.b16 %v396
    %v593 = vunpack.c.h.b16 %v396
    %v594 = vunpack.c.l.b16 %v397
    %v595 = vunpack.c.h.b16 %v397
    %v596 = vunpack.c.l.b16 %v398
    %v597 = vunpack.c.h.b16 %v398
    %v598 = vunpack.c.l.b16 %v399
    %v599 = vunpack.c.h.b16 %v399
    %v600 = vunpack.c.l.b16 %v400
    %v601 = vunpack.c.h.b16 %v400
    %v602 = vunpack.c.l.b16 %v401
    %v603 = vunpack.c.h.b16 %v401
    %v604 = vunpack.c.l.b16 %v402
    %v605 = vunpack.c.h.b16 %v402
    %v606 = vunpack.c.l.b16 %v403
    %v607 = vunpack.c.h.b16 %v403
    %v608 = vunpack.c.l.b16 %v404
    %v609 = vunpack.c.h.b16 %v404
    %v610 = vunpack.c.l.b16 %v405
    %v611 = vunpack.c.h.b16 %v405
    %v612 = vunpack.c.l.b16 %v406
    %v613 = vunpack.c.h.b16 %v406
    %v614 = vunpack.c.l.b16 %v407
    %v615 = vunpack.c.h.b16 %v407
    %v616 = vunpack.c.l.b16 %v408
    %v617 = vunpack.c.h.b16 %v408
    %v618 = vunpack.c.l.b16 %v409
    %v619 = vunpack.c.h.b16 %v409
    %v620 = vunpack.c.l.b16 %v410
    %v621 = vunpack.c.h.b16 %v410
    %v622 = vunpack.c.l.b16 %v411
    %v623 = vunpack.c.h.b16 %v411
    %v624 = vunpack.c.l.b16 %v412
    %v625 = vunpack.c.h.b16 %v412
    %v626 = vunpack.c.l.b16 %v413
    %v627 = vunpack.c.h.b16 %v413
    %v628 = vunpack.c.l.b16 %v414
    %v629 = vunpack.c.h.b16 %v414
    %v630 = vunpack.c.l.b16 %v415
    %v631 = vunpack.c.h.b16 %v415
    %v632 = vunpack.c.l.b16 %v416
    %v633 = vunpack.c.h.b16 %v416
    %v634 = vunpack.c.l.b16 %v417
    %v635 = vunpack.c.h.b16 %v417
    %v636 = vunpack.c.l.b16 %v418
    %v637 = vunpack.c.h.b16 %v418
    %v638 = vunpack.c.l.b16 %v419
    %v639 = vunpack.c.h.b16 %v419
    %v640 = vunpack.c.l.b16 %v420
    %v641 = vunpack.c.h.b16 %v420
    %v642 = vunpack.c.l.b16 %v421
    %v643 = vunpack.c.h.b16 %v421
    %v644 = vunpack.c.l.b16 %v422
    %v645 = vunpack.c.h.b16 %v422
    %v646 = vunpack.c.l.b16 %v423
    %v647 = vunpack.c.h.b16 %v423
    %v648 = vunpack.c.l.b16 %v424
    %v649 = vunpack.c.h.b16 %v424
    %v650 = vunpack.c.l.b16 %v425
    %v651 = vunpack.c.h.b16 %v425
    %v652 = vunpack.c.l.b16 %v426
    %v653 = vunpack.c.h.b16 %v426
    %v654 = vunpack.c.l.b16 %v427
    %v655 = vunpack.c.h.b16 %v427
    %v656 = vunpack.c.l.b16 %v428
    %v657 = vunpack.c.h.b16 %v428
    %v658 = vunpack.c.l.b16 %v429
    %v659 = vunpack.c.h.b16 %v429
    %v660 = vunpack.c.l.b16 %v430
    %v661 = vunpack.c.h.b16 %v430
    %v662 = vunpack.c.l.b16 %v431
    %v663 = vunpack.c.h.b16 %v431
    %v664 = vunpack.c.l.b16 %v432
    %v665 = vunpack.c.h.b16 %v432
    %v666 = vunpack.c.l.b16 %v433
    %v667 = vunpack.c.h.b16 %v433
    %v668 = vunpack.c.l.b16 %v434
    %v669 = vunpack.c.h.b16 %v434
    %v670 = vunpack.c.l.b16 %v435
    %v671 = vunpack.c.h.b16 %v435
    %v672 = vunpack.c.l.b16 %v436
    %v673 = vunpack.c.h.b16 %v436
    %v674 = vunpack.c.l.b16 %v437
    %v675 = vunpack.c.h.b16 %v437
    %v676 = vunpack.c.l.b16 %v438
    %v677 = vunpack.c.h.b16 %v438
    %v678 = vunpack.c.l.b16 %v439
    %v679 = vunpack.c.h.b16 %v439
    %v680 = vunpack.c.l.b16 %v440
    %v681 = vunpack.c.h.b16 %v440
    %v682 = vunpack.c.l.b16 %v441
    %v683 = vunpack.c.h.b16 %v441
    %v684 = vunpack.c.l.b16 %v442
    %v685 = vunpack.c.h.b16 %v442
    %v686 = vunpack.c.l.b16 %v443
    %v687 = vunpack.c.h.b16 %v443
    %v688 = vunpack.c.l.b16 %v444
    %v689 = vunpack.c.h.b16 %v444
    %v690 = vunpack.c.l.b16 %v445
    %v691 = vunpack.c.h.b16 %v445
    %v692 = vunpack.c.l.b16 %v446
    %v693 = vunpack.c.h.b16 %v446
    %v694 = vunpack.c.l.b16 %v447
    %v695 = vunpack.c.h.b16 %v447
    %v696 = vunpack.c.l.b16 %v448
    %v697 = vunpack.c.h.b16 %v448
    %v698 = vunpack.c.l.b16 %v449
    %v699 = vunpack.c.h.b16 %v449
    %v700 = vunpack.c.l.b16 %v450
    %v701 = vunpack.c.h.b16 %v450
    %v702 = vunpack.c.l.b16 %v451
    %v703 = vunpack.c.h.b16 %v451
    %v704 = vpack.c.b16 %v546, %v544
    %v705 = vpack.c.b16 %v547, %v545
    %v706 = vpack.c.b16 %v550, %v548
    %v707 = vpack.c.b16 %v551, %v549
    %v708 = vpack.c.b16 %v554, %v552
    %v709 = vpack.c.b16 %v555, %v553
    %v710 = vpack.c.b16 %v558, %v556
    %v711 = vpack.c.b16 %v559, %v557
    %v712 = vpack.c.b16 %v562, %v560
    %v713 = vpack.c.b16 %v563, %v561
    %v714 = vpack.c.b16 %v566, %v564
    %v715 = vpack.c.b16 %v567, %v565
    %v716 = vpack.c.b16 %v570, %v568
    %v717 = vpack.c.b16 %v571, %v569
    %v718 = vpack.c.b16 %v574, %v572
    %v719 = vpack.c.b16 %v575, %v573
    %v720 = vpack.c.b16 %v578, %v576
    %v721 = vpack.c.b16 %v579, %v577
    %v722 = vpack.c.b16 %v582, %v580
    %v723 = vpack.c.b16 %v583, %v581
    %v724 = vpack.c.b16 %v586, %v584
    %v725 = vpack.c.b16 %v587, %v585
    %v726 = vpack.c.b16 %v590, %v588
    %v727 = vpack.c.b16 %v591, %v589
    %v728 = vpack.c.b16 %v594, %v592
    %v729 = vpack.c.b16 %v595, %v593
    %v730 = vpack.c.b16 %v598, %v596
    %v731 = vpack.c.b16 %v599, %v597
    %v732 = vpack.c.b16 %v602, %v600
    %v733 = vpack.c.b16 %v603, %v601
    %v734 = vpack.c.b16 %v606, %v604
    %v735 = vpack.c.b16 %v607, %v605
    %v736 = vpack.c.b16 %v610, %v608
    %v737 = vpack.c.b16 %v611, %v609
    %v738 = vpack.c.b16 %v614, %v612
    %v739 = vpack.c.b16 %v615, %v613
    %v740 = vpack.c.b16 %v618, %v616
    %v741 = vpack.c.b16 %v619, %v617
    %v742 = vpack.c.b16 %v622, %v620
    %v743 = vpack.c.b16 %v623, %v621
    %v744 = vpack.c.b16 %v626, %v624
    %v745 = vpack.c.b16 %v627, %v625
    %v746 = vpack.c.b16 %v630, %v628
    %v747 = vpack.c.b16 %v631, %v629
    %v748 = vpack.c.b16 %v634, %v632
    %v749 = vpack.c.b16 %v635, %v633
    %v750 = vpack.c.b16 %v638, %v636
    %v751 = vpack.c.b16 %v639, %v637
    %v752 = vpack.c.b16 %v642, %v640
    %v753 = vpack.c.b16 %v643, %v641
    %v754 = vpack.c.b16 %v646, %v644
    %v755 = vpack.c.b16 %v647, %v645
    %v756 = vpack.c.b16 %v650, %v648
    %v757 = vpack.c.b16 %v651, %v649
    %v758 = vpack.c.b16 %v654, %v652
    %v759 = vpack.c.b16 %v655, %v653
    %v760 = vpack.c.b16 %v658, %v656
    %v761 = vpack.c.b16 %v659, %v657
    %v762 = vpack.c.b16 %v662, %v660
    %v763 = vpack.c.b16 %v663, %v661
    %v764 = vpack.c.b16 %v666, %v664
    %v765 = vpack.c.b16 %v667, %v665
    %v766 = vpack.c.b16 %v670, %v668
    %v767 = vpack.c.b16 %v671, %v669
    %v768 = vpack.c.b16 %v674, %v672
    %v769 = vpack.c.b16 %v675, %v673
    %v770 = vpack.c.b16 %v678, %v676
    %v771 = vpack.c.b16 %v679, %v677
    %v772 = vpack.c.b16 %v682, %v680
    %v773 = vpack.c.b16 %v683, %v681
    %v774 = vpack.c.b16 %v686, %v684
    %v775 = vpack.c.b16 %v687, %v685
    %v776 = vpack.c.b16 %v690, %v688
    %v777 = vpack.c.b16 %v691, %v689
    %v778 = vpack.c.b16 %v694, %v692
    %v779 = vpack.c.b16 %v695, %v693
    %v780 = vpack.c.b16 %v698, %v696
    %v781 = vpack.c.b16 %v699, %v697
    %v782 = vpack.c.b16 %v702, %v700
    %v783 = vpack.c.b16 %v703, %v701
    %864 = vmatprep.subr.bf16.mxu0 %v719
    %865 = vmatpush1.bf16.msra.mxu0 %v718
    %866 = vmatprep.subr.bf16.mxu0 %v717
    %867 = vmatpush1.bf16.msra.mxu0 %v716
    %868 = vmatprep.subr.bf16.mxu0 %v715
    %869 = vmatpush1.bf16.msra.mxu0 %v714
    %870 = vmatprep.subr.bf16.mxu0 %v713
    %871 = vmatpush1.bf16.msra.mxu0 %v712
    %872 = vmatprep.subr.bf16.mxu0 %v711
    %873 = vmatpush1.bf16.msra.mxu0 %v710
    %874 = vmatprep.subr.bf16.mxu0 %v709
    %875 = vmatpush1.bf16.msra.mxu0 %v708
    %876 = vmatprep.subr.bf16.mxu0 %v707
    %877 = vmatpush1.bf16.msra.mxu0 %v706
    %878 = vmatprep.subr.bf16.mxu0 %v705
    %879 = vmatpush1.bf16.msra.mxu0 %v704
    %880 = vmatprep.subr.bf16.mxu0 %v735
    %881 = vmatpush2.bf16.msra.mxu0 %v734
    %882 = vmatprep.subr.bf16.mxu0 %v733
    %883 = vmatpush2.bf16.msra.mxu0 %v732
    %884 = vmatprep.subr.bf16.mxu0 %v731
    %885 = vmatpush2.bf16.msra.mxu0 %v730
    %886 = vmatprep.subr.bf16.mxu0 %v729
    %887 = vmatpush2.bf16.msra.mxu0 %v728
    %888 = vmatprep.subr.bf16.mxu0 %v727
    %889 = vmatpush2.bf16.msra.mxu0 %v726
    %890 = vmatprep.subr.bf16.mxu0 %v725
    %891 = vmatpush2.bf16.msra.mxu0 %v724
    %892 = vmatprep.subr.bf16.mxu0 %v723
    %893 = vmatpush2.bf16.msra.mxu0 %v722
    %894 = vmatprep.subr.bf16.mxu0 %v721
    %895 = vmatpush2.bf16.msra.mxu0 %v720
    %896 = vmatprep.mubr.bf16.mxu0 %v226
    %897 = vmatmul.mubr.bf16.gmra.mxu0 %v175
    %v898 = vpop.f32.mrf.mxu0
    %v899 = vadd.f32 %v457, %v898
    %v900 = vpop.f32.mrf.mxu0
    %v901 = vadd.f32 %v461, %v900
    %v902 = vpop.f32.mrf.mxu0
    %v903 = vpop.f32.mrf.mxu0
    %904 = vdwg.mxu0
    %905 = vmatprep.subr.bf16.mxu0 %v751
    %906 = vmatpush1.bf16.msra.mxu0 %v750
    %907 = vmatprep.subr.bf16.mxu0 %v749
    %908 = vmatpush1.bf16.msra.mxu0 %v748
    %909 = vmatprep.subr.bf16.mxu0 %v747
    %910 = vmatpush1.bf16.msra.mxu0 %v746
    %911 = vmatprep.subr.bf16.mxu0 %v745
    %912 = vmatpush1.bf16.msra.mxu0 %v744
    %913 = vmatprep.subr.bf16.mxu0 %v743
    %914 = vmatpush1.bf16.msra.mxu0 %v742
    %915 = vmatprep.subr.bf16.mxu0 %v741
    %916 = vmatpush1.bf16.msra.mxu0 %v740
    %917 = vmatprep.subr.bf16.mxu0 %v739
    %918 = vmatpush1.bf16.msra.mxu0 %v738
    %919 = vmatprep.subr.bf16.mxu0 %v737
    %920 = vmatpush1.bf16.msra.mxu0 %v736
    %921 = vmatprep.subr.bf16.mxu0 %v767
    %922 = vmatpush2.bf16.msra.mxu0 %v766
    %923 = vmatprep.subr.bf16.mxu0 %v765
    %924 = vmatpush2.bf16.msra.mxu0 %v764
    %925 = vmatprep.subr.bf16.mxu0 %v763
    %926 = vmatpush2.bf16.msra.mxu0 %v762
    %927 = vmatprep.subr.bf16.mxu0 %v761
    %928 = vmatpush2.bf16.msra.mxu0 %v760
    %929 = vmatprep.subr.bf16.mxu0 %v759
    %930 = vmatpush2.bf16.msra.mxu0 %v758
    %931 = vmatprep.subr.bf16.mxu0 %v757
    %932 = vmatpush2.bf16.msra.mxu0 %v756
    %933 = vmatprep.subr.bf16.mxu0 %v755
    %934 = vmatpush2.bf16.msra.mxu0 %v754
    %935 = vmatprep.subr.bf16.mxu0 %v753
    %936 = vmatpush2.bf16.msra.mxu0 %v752
    %937 = vmatprep.mubr.bf16.mxu0 %v324
    %938 = vmatmul.mubr.bf16.gmra.mxu0 %v273
    %v939 = vpop.f32.mrf.mxu0
    %v940 = vadd.f32 %v899, %v939
    %v941 = vpop.f32.mrf.mxu0
    %v942 = vadd.f32 %v901, %v941
    %v943 = vpop.f32.mrf.mxu0
    %v944 = vpop.f32.mrf.mxu0
    %945 = vdwg.mxu0
    %946 = vmatprep.subr.bf16.mxu0 %v783
    %947 = vmatpush1.bf16.msra.mxu0 %v782
    %948 = vmatprep.subr.bf16.mxu0 %v781
    %949 = vmatpush1.bf16.msra.mxu0 %v780
    %950 = vmatprep.subr.bf16.mxu0 %v779
    %951 = vmatpush1.bf16.msra.mxu0 %v778
    %952 = vmatprep.subr.bf16.mxu0 %v777
    %953 = vmatpush1.bf16.msra.mxu0 %v776
    %954 = vmatprep.subr.bf16.mxu0 %v775
    %955 = vmatpush1.bf16.msra.mxu0 %v774
    %956 = vmatprep.subr.bf16.mxu0 %v773
    %957 = vmatpush1.bf16.msra.mxu0 %v772
    %958 = vmatprep.subr.bf16.mxu0 %v771
    %959 = vmatpush1.bf16.msra.mxu0 %v770
    %960 = vmatprep.subr.bf16.mxu0 %v769
    %961 = vmatpush1.bf16.msra.mxu0 %v768
    %962 = vmatprep.subr.bf16.mxu0 0
    %963 = vmatpush2.bf16.msra.mxu0 0
    %964 = vmatprep.subr.bf16.mxu0 0
    %965 = vmatpush2.bf16.msra.mxu0 0
    %966 = vmatprep.subr.bf16.mxu0 0
    %967 = vmatpush2.bf16.msra.mxu0 0
    %968 = vmatprep.subr.bf16.mxu0 0
    %969 = vmatpush2.bf16.msra.mxu0 0
    %970 = vmatprep.subr.bf16.mxu0 0
    %971 = vmatpush2.bf16.msra.mxu0 0
    %972 = vmatprep.subr.bf16.mxu0 0
    %973 = vmatpush2.bf16.msra.mxu0 0
    %974 = vmatprep.subr.bf16.mxu0 0
    %975 = vmatpush2.bf16.msra.mxu0 0
    %976 = vmatprep.subr.bf16.mxu0 0
    %977 = vmatpush2.bf16.msra.mxu0 0
    %978 = vmatprep.mubr.bf16.mxu0 0
    %979 = vmatmul.mubr.bf16.gmra.mxu0 %v371
    %v980 = vpop.f32.mrf.mxu0
    %v981 = vadd.f32 %v940, %v980
    %v982 = vpop.f32.mrf.mxu0
    %v983 = vadd.f32 %v942, %v982
    %v984 = vpop.f32.mrf.mxu0
    %v985 = vpop.f32.mrf.mxu0
    %986 = vdwg.mxu0
    %vm987 = vcmp.gt.f32.partialorder %v981, 0.0
    %vm988 = vcmp.gt.f32.partialorder %v983, 0.0
    %v989 = vmin.f32 %v981, 0.0
    %v990 = vmin.f32 %v983, 0.0
    %v991 = vmul.f32 %v989, 1.442695
    %v992 = vpow.pop %v991
    %v993 = vmul.f32 %v990, 1.442695
    %v994 = vpow.pop %v993
    %v995 = vsub.f32 %v992, 1.0
    %v996 = vsub.f32 %v994, 1.0
    %v997 = vsel %vm987, %v981, %v995
    %v998 = vsel %vm988, %v983, %v996
    %v999 = vpack.c.bf16 %v997, %v997
    %v1000 = vpack.c.bf16 %v998, %v998
    %v1001 = vld [vmem:[%s6] sm:$0xf]
    %v1002 = vld [vmem:[%s6 + $0x4] sm:$0xf]
    %v1003 = vld [vmem:[%s6 + $0x8] sm:$0xf]
    %v1004 = vld [vmem:[%s6 + $0xc] sm:$0xf]
    %v1005 = vld [vmem:[%s6 + $0x10] sm:$0xf]
    %v1006 = vld [vmem:[%s6 + $0x14] sm:$0xf]
    %v1007 = vld [vmem:[%s6 + $0x18] sm:$0xf]
    %v1008 = vld [vmem:[%s6 + $0x1c] sm:$0xf]
    %v1009 = vld [vmem:[%s6 + $0x20] sm:$0xf]
    %v1010 = vld [vmem:[%s6 + $0x24] sm:$0xf]
    %v1011 = vld [vmem:[%s6 + $0x28] sm:$0xf]
    %v1012 = vld [vmem:[%s6 + $0x2c] sm:$0xf]
    %v1013 = vld [vmem:[%s6 + $0x30] sm:$0xf]
    %v1014 = vld [vmem:[%s6 + $0x34] sm:$0xf]
    %v1015 = vld [vmem:[%s6 + $0x38] sm:$0xf]
    %v1016 = vld [vmem:[%s6 + $0x3c] sm:$0xf]
    %v1017 = vld [vmem:[%s6 + $0x40] sm:$0xf]
    %v1018 = vld [vmem:[%s6 + $0x44] sm:$0xf]
    %v1019 = vld [vmem:[%s6 + $0x48] sm:$0xf]
    %v1020 = vld [vmem:[%s6 + $0x4c] sm:$0xf]
    %v1021 = vld [vmem:[%s7] sm:$0x1]
    %v1023 = vlaneseq
    %v1024 = vshrl.u32 %v1023, 7
    %v1025 = vsub.s32 0, %v1024
    %v1026 = vrot.slane %v1021, %v1025
    %v1048 = vunpack.c.l.b16 %v1001
    %v1049 = vunpack.c.l.b16 %v1002
    %v1050 = vunpack.c.l.b16 %v1003
    %v1051 = vunpack.c.l.b16 %v1004
    %v1052 = vunpack.c.l.b16 %v1005
    %v1053 = vunpack.c.l.b16 %v1006
    %v1054 = vunpack.c.l.b16 %v1007
    %v1055 = vunpack.c.l.b16 %v1008
    %v1056 = vunpack.c.l.b16 %v1009
    %v1057 = vunpack.c.l.b16 %v1010
    %v1058 = vunpack.c.l.b16 %v1011
    %v1059 = vunpack.c.l.b16 %v1012
    %v1060 = vunpack.c.l.b16 %v1013
    %v1061 = vunpack.c.l.b16 %v1014
    %v1062 = vunpack.c.l.b16 %v1015
    %v1063 = vunpack.c.l.b16 %v1016
    %v1064 = vunpack.c.l.b16 %v1017
    %v1065 = vunpack.c.l.b16 %v1018
    %v1066 = vunpack.c.l.b16 %v1019
    %v1067 = vunpack.c.l.b16 %v1020
    %v1068 = vpack.c.b16 %v1049, %v1048
    %v1069 = vpack.c.b16 %v1051, %v1050
    %v1070 = vpack.c.b16 %v1053, %v1052
    %v1071 = vpack.c.b16 %v1055, %v1054
    %v1072 = vpack.c.b16 %v1057, %v1056
    %v1073 = vpack.c.b16 %v1059, %v1058
    %v1074 = vpack.c.b16 %v1061, %v1060
    %v1075 = vpack.c.b16 %v1063, %v1062
    %v1076 = vpack.c.b16 %v1065, %v1064
    %v1077 = vpack.c.b16 %v1067, %v1066
    %vm1088 = vcmask 261120
    %v1090 = vsel %vm1088, %v1000, 0
    %1092 = vmatprep.subr.bf16.mxu0 0
    %1093 = vmatpush1.bf16.msra.mxu0 %v1075
    %1094 = vmatprep.subr.bf16.mxu0 0
    %1095 = vmatpush1.bf16.msra.mxu0 %v1074
    %1096 = vmatprep.subr.bf16.mxu0 0
    %1097 = vmatpush1.bf16.msra.mxu0 %v1073
    %1098 = vmatprep.subr.bf16.mxu0 0
    %1099 = vmatpush1.bf16.msra.mxu0 %v1072
    %1100 = vmatprep.subr.bf16.mxu0 0
    %1101 = vmatpush1.bf16.msra.mxu0 %v1071
    %1102 = vmatprep.subr.bf16.mxu0 0
    %1103 = vmatpush1.bf16.msra.mxu0 %v1070
    %1104 = vmatprep.subr.bf16.mxu0 0
    %1105 = vmatpush1.bf16.msra.mxu0 %v1069
    %1106 = vmatprep.subr.bf16.mxu0 0
    %1107 = vmatpush1.bf16.msra.mxu0 %v1068
    %1108 = vmatprep.subr.bf16.mxu0 0
    %1109 = vmatpush2.bf16.msra.mxu0 0
    %1110 = vmatprep.subr.bf16.mxu0 0
    %1111 = vmatpush2.bf16.msra.mxu0 0
    %1112 = vmatprep.subr.bf16.mxu0 0
    %1113 = vmatpush2.bf16.msra.mxu0 0
    %1114 = vmatprep.subr.bf16.mxu0 0
    %1115 = vmatpush2.bf16.msra.mxu0 0
    %1116 = vmatprep.subr.bf16.mxu0 0
    %1117 = vmatpush2.bf16.msra.mxu0 0
    %1118 = vmatprep.subr.bf16.mxu0 0
    %1119 = vmatpush2.bf16.msra.mxu0 0
    %1120 = vmatprep.subr.bf16.mxu0 0
    %1121 = vmatpush2.bf16.msra.mxu0 %v1077
    %1122 = vmatprep.subr.bf16.mxu0 0
    %1123 = vmatpush2.bf16.msra.mxu0 %v1076
    %1124 = vmatprep.mubr.bf16.mxu0 %v1090
    %1125 = vmatmul.mubr.bf16.gmra.mxu0 %v999
    %v1126 = vpop.f32.mrf.mxu0
    %v1127 = vadd.f32 %v1026, %v1126
    %v1128 = vpop.f32.mrf.mxu0
    %v1129 = vpop.f32.mrf.mxu0
    %v1130 = vpop.f32.mrf.mxu0
    %1131 = vdwg.mxu0
    %vm1132 = vcmp.gt.f32.partialorder %v1127, 0.0
    %v1133 = vmin.f32 %v1127, 0.0
    %v1134 = vmul.f32 %v1133, 1.442695
    %v1135 = vpow.pop %v1134
    %v1136 = vsub.f32 %v1135, 1.0
    %v1137 = vsel %vm1132, %v1127, %v1136
    %v1138 = vpack.c.bf16 %v1137, %v1137
    %v1139 = vld [vmem:[%s8] sm:$0xf]
    %v1140 = vld [vmem:[%s8 + $0x4] sm:$0xf]
    %v1141 = vld [vmem:[%s8 + $0x8] sm:$0xf]
    %v1142 = vld [vmem:[%s8 + $0xc] sm:$0x7]
    %v1143 = vld [vmem:[%s9] sm:$0x1]
    %v1145 = vlaneseq
    %v1146 = vshrl.u32 %v1145, 7
    %v1147 = vsub.s32 0, %v1146
    %v1148 = vrot.slane %v1143, %v1147
    %v1154 = vunpack.c.l.b16 %v1139
    %v1155 = vunpack.c.l.b16 %v1140
    %v1156 = vunpack.c.l.b16 %v1141
    %v1157 = vunpack.c.l.b16 %v1142
    %v1158 = vpack.c.b16 %v1155, %v1154
    %v1159 = vpack.c.b16 %v1157, %v1156
    %vm1161 = vcmask 244736
    %v1163 = vsel %vm1161, %v1138, 0
    %vm1165 = vcmask 1046528
    %v1167 = vsel %vm1165, %v1159, 0
    %1169 = vmatprep.subr.bf16.mxu0 0
    %1170 = vmatpush1.bf16.msra.mxu0 0
    %1171 = vmatprep.subr.bf16.mxu0 0
    %1172 = vmatpush1.bf16.msra.mxu0 0
    %1173 = vmatprep.subr.bf16.mxu0 0
    %1174 = vmatpush1.bf16.msra.mxu0 0
    %1175 = vmatprep.subr.bf16.mxu0 0
    %1176 = vmatpush1.bf16.msra.mxu0 0
    %1177 = vmatprep.subr.bf16.mxu0 0
    %1178 = vmatpush1.bf16.msra.mxu0 0
    %1179 = vmatprep.subr.bf16.mxu0 0
    %1180 = vmatpush1.bf16.msra.mxu0 0
    %1181 = vmatprep.subr.bf16.mxu0 0
    %1182 = vmatpush1.bf16.msra.mxu0 %v1167
    %1183 = vmatprep.subr.bf16.mxu0 0
    %1184 = vmatpush1.bf16.msra.mxu0 %v1158
    %1185 = vmatprep.subr.bf16.mxu0 0
    %1186 = vmatpush2.bf16.msra.mxu0 0
    %1187 = vmatprep.subr.bf16.mxu0 0
    %1188 = vmatpush2.bf16.msra.mxu0 0
    %1189 = vmatprep.subr.bf16.mxu0 0
    %1190 = vmatpush2.bf16.msra.mxu0 0
    %1191 = vmatprep.subr.bf16.mxu0 0
    %1192 = vmatpush2.bf16.msra.mxu0 0
    %1193 = vmatprep.subr.bf16.mxu0 0
    %1194 = vmatpush2.bf16.msra.mxu0 0
    %1195 = vmatprep.subr.bf16.mxu0 0
    %1196 = vmatpush2.bf16.msra.mxu0 0
    %1197 = vmatprep.subr.bf16.mxu0 0
    %1198 = vmatpush2.bf16.msra.mxu0 0
    %1199 = vmatprep.subr.bf16.mxu0 0
    %1200 = vmatpush2.bf16.msra.mxu0 0
    %1201 = vmatprep.mubr.bf16.mxu0 0
    %1202 = vmatmul.mubr.bf16.gmra.mxu0 %v1163
    %v1203 = vpop.f32.mrf.mxu0
    %v1204 = vadd.f32 %v1148, %v1203
    %v1205 = vpop.f32.mrf.mxu0
    %v1206 = vpop.f32.mrf.mxu0
    %v1207 = vpop.f32.mrf.mxu0
    %1208 = vdwg.mxu0
    %v1209 = vtanh.pop %v1204
    %v1210 = vld [vmem:[%s1] sm:$0xf]
    %v1211 = vld [vmem:[%s10] sm:$0xf]
    %v1212 = vld [vmem:[%s10 + $0x4] sm:$0xf]
    %v1213 = vld [vmem:[%s10 + $0x8] sm:$0xf]
    %v1214 = vld [vmem:[%s10 + $0xc] sm:$0xf]
    %v1215 = vld [vmem:[%s11] sm:$0x1]
    %v1217 = vlaneseq
    %v1218 = vshrl.u32 %v1217, 7
    %v1219 = vsub.s32 0, %v1218
    %v1220 = vrot.slane %v1215, %v1219
    %v1226 = vunpack.c.l.b16 %v1211
    %v1227 = vunpack.c.l.b16 %v1212
    %v1228 = vunpack.c.l.b16 %v1213
    %v1229 = vunpack.c.l.b16 %v1214
    %v1230 = vpack.c.b16 %v1227, %v1226
    %v1231 = vpack.c.b16 %v1229, %v1228
    %v1235 = vsel %vm1088, %v1210, 0
    %1237 = vmatprep.subr.bf16.mxu0 0
    %1238 = vmatpush1.bf16.msra.mxu0 0
    %1239 = vmatprep.subr.bf16.mxu0 0
    %1240 = vmatpush1.bf16.msra.mxu0 0
    %1241 = vmatprep.subr.bf16.mxu0 0
    %1242 = vmatpush1.bf16.msra.mxu0 0
    %1243 = vmatprep.subr.bf16.mxu0 0
    %1244 = vmatpush1.bf16.msra.mxu0 0
    %1245 = vmatprep.subr.bf16.mxu0 0
    %1246 = vmatpush1.bf16.msra.mxu0 0
    %1247 = vmatprep.subr.bf16.mxu0 0
    %1248 = vmatpush1.bf16.msra.mxu0 0
    %1249 = vmatprep.subr.bf16.mxu0 0
    %1250 = vmatpush1.bf16.msra.mxu0 %v1231
    %1251 = vmatprep.subr.bf16.mxu0 0
    %1252 = vmatpush1.bf16.msra.mxu0 %v1230
    %1253 = vmatprep.subr.bf16.mxu0 0
    %1254 = vmatpush2.bf16.msra.mxu0 0
    %1255 = vmatprep.subr.bf16.mxu0 0
    %1256 = vmatpush2.bf16.msra.mxu0 0
    %1257 = vmatprep.subr.bf16.mxu0 0
    %1258 = vmatpush2.bf16.msra.mxu0 0
    %1259 = vmatprep.subr.bf16.mxu0 0
    %1260 = vmatpush2.bf16.msra.mxu0 0
    %1261 = vmatprep.subr.bf16.mxu0 0
    %1262 = vmatpush2.bf16.msra.mxu0 0
    %1263 = vmatprep.subr.bf16.mxu0 0
    %1264 = vmatpush2.bf16.msra.mxu0 0
    %1265 = vmatprep.subr.bf16.mxu0 0
    %1266 = vmatpush2.bf16.msra.mxu0 0
    %1267 = vmatprep.subr.bf16.mxu0 0
    %1268 = vmatpush2.bf16.msra.mxu0 0
    %1269 = vmatprep.mubr.bf16.mxu0 0
    %1270 = vmatmul.mubr.bf16.gmra.mxu0 %v1235
    %v1271 = vpop.f32.mrf.mxu0
    %v1272 = vadd.f32 %v1220, %v1271
    %v1273 = vpop.f32.mrf.mxu0
    %v1274 = vpop.f32.mrf.mxu0
    %v1275 = vpop.f32.mrf.mxu0
    %1276 = vdwg.mxu0
    %vm1277 = vcmp.gt.f32.partialorder %v1272, 0.0
    %v1278 = vmin.f32 %v1272, 0.0
    %v1279 = vmul.f32 %v1278, 1.442695
    %v1280 = vpow.pop %v1279
    %v1281 = vsub.f32 %v1280, 1.0
    %v1282 = vsel %vm1277, %v1272, %v1281
    %v1283 = vpack.c.bf16 %v1282, %v1282
    %v1284 = vld [vmem:[%s12] sm:$0xf]
    %v1285 = vld [vmem:[%s12 + $0x4] sm:$0xf]
    %v1286 = vld [vmem:[%s12 + $0x8] sm:$0xf]
    %v1287 = vld [vmem:[%s12 + $0xc] sm:$0xf]
    %v1288 = vld [vmem:[%s12 + $0x10] sm:$0xf]
    %v1289 = vld [vmem:[%s12 + $0x14] sm:$0xf]
    %v1290 = vld [vmem:[%s12 + $0x18] sm:$0xf]
    %v1291 = vld [vmem:[%s12 + $0x1c] sm:$0xf]
    %v1292 = vld [vmem:[%s12 + $0x20] sm:$0xf]
    %v1293 = vld [vmem:[%s12 + $0x24] sm:$0xf]
    %v1294 = vld [vmem:[%s12 + $0x28] sm:$0xf]
    %v1295 = vld [vmem:[%s12 + $0x2c] sm:$0xf]
    %v1296 = vld [vmem:[%s12 + $0x30] sm:$0xf]
    %v1297 = vld [vmem:[%s12 + $0x34] sm:$0xf]
    %v1298 = vld [vmem:[%s12 + $0x38] sm:$0xf]
    %v1299 = vld [vmem:[%s12 + $0x3c] sm:$0xf]
    %v1300 = vld [vmem:[%s13] sm:$0x1]
    %v1302 = vlaneseq
    %v1303 = vshrl.u32 %v1302, 7
    %v1304 = vsub.s32 0, %v1303
    %v1305 = vrot.slane %v1300, %v1304
    %v1323 = vunpack.c.l.b16 %v1284
    %v1324 = vunpack.c.l.b16 %v1285
    %v1325 = vunpack.c.l.b16 %v1286
    %v1326 = vunpack.c.l.b16 %v1287
    %v1327 = vunpack.c.l.b16 %v1288
    %v1328 = vunpack.c.l.b16 %v1289
    %v1329 = vunpack.c.l.b16 %v1290
    %v1330 = vunpack.c.l.b16 %v1291
    %v1331 = vunpack.c.l.b16 %v1292
    %v1332 = vunpack.c.l.b16 %v1293
    %v1333 = vunpack.c.l.b16 %v1294
    %v1334 = vunpack.c.l.b16 %v1295
    %v1335 = vunpack.c.l.b16 %v1296
    %v1336 = vunpack.c.l.b16 %v1297
    %v1337 = vunpack.c.l.b16 %v1298
    %v1338 = vunpack.c.l.b16 %v1299
    %v1339 = vpack.c.b16 %v1324, %v1323
    %v1340 = vpack.c.b16 %v1326, %v1325
    %v1341 = vpack.c.b16 %v1328, %v1327
    %v1342 = vpack.c.b16 %v1330, %v1329
    %v1343 = vpack.c.b16 %v1332, %v1331
    %v1344 = vpack.c.b16 %v1334, %v1333
    %v1345 = vpack.c.b16 %v1336, %v1335
    %v1346 = vpack.c.b16 %v1338, %v1337
    %1355 = vmatprep.subr.bf16.mxu0 0
    %1356 = vmatpush1.bf16.msra.mxu0 %v1346
    %1357 = vmatprep.subr.bf16.mxu0 0
    %1358 = vmatpush1.bf16.msra.mxu0 %v1345
    %1359 = vmatprep.subr.bf16.mxu0 0
    %1360 = vmatpush1.bf16.msra.mxu0 %v1344
    %1361 = vmatprep.subr.bf16.mxu0 0
    %1362 = vmatpush1.bf16.msra.mxu0 %v1343
    %1363 = vmatprep.subr.bf16.mxu0 0
    %1364 = vmatpush1.bf16.msra.mxu0 %v1342
    %1365 = vmatprep.subr.bf16.mxu0 0
    %1366 = vmatpush1.bf16.msra.mxu0 %v1341
    %1367 = vmatprep.subr.bf16.mxu0 0
    %1368 = vmatpush1.bf16.msra.mxu0 %v1340
    %1369 = vmatprep.subr.bf16.mxu0 0
    %1370 = vmatpush1.bf16.msra.mxu0 %v1339
    %1371 = vmatprep.subr.bf16.mxu0 0
    %1372 = vmatpush2.bf16.msra.mxu0 0
    %1373 = vmatprep.subr.bf16.mxu0 0
    %1374 = vmatpush2.bf16.msra.mxu0 0
    %1375 = vmatprep.subr.bf16.mxu0 0
    %1376 = vmatpush2.bf16.msra.mxu0 0
    %1377 = vmatprep.subr.bf16.mxu0 0
    %1378 = vmatpush2.bf16.msra.mxu0 0
    %1379 = vmatprep.subr.bf16.mxu0 0
    %1380 = vmatpush2.bf16.msra.mxu0 0
    %1381 = vmatprep.subr.bf16.mxu0 0
    %1382 = vmatpush2.bf16.msra.mxu0 0
    %1383 = vmatprep.subr.bf16.mxu0 0
    %1384 = vmatpush2.bf16.msra.mxu0 0
    %1385 = vmatprep.subr.bf16.mxu0 0
    %1386 = vmatpush2.bf16.msra.mxu0 0
    %1387 = vmatprep.mubr.bf16.mxu0 0
    %1388 = vmatmul.mubr.bf16.gmra.mxu0 %v1283
    %v1389 = vpop.f32.mrf.mxu0
    %v1390 = vadd.f32 %v1305, %v1389
    %v1391 = vpop.f32.mrf.mxu0
    %v1392 = vpop.f32.mrf.mxu0
    %v1393 = vpop.f32.mrf.mxu0
    %1394 = vdwg.mxu0
    %vm1395 = vcmp.gt.f32.partialorder %v1390, 0.0
    %v1396 = vmin.f32 %v1390, 0.0
    %v1397 = vmul.f32 %v1396, 1.442695
    %v1398 = vpow.pop %v1397
    %v1399 = vsub.f32 %v1398, 1.0
    %v1400 = vsel %vm1395, %v1390, %v1399
    %v1401 = vpack.c.bf16 %v1400, %v1400
    %v1402 = vld [vmem:[%s14] sm:$0xf]
    %v1403 = vld [vmem:[%s14 + $0x4] sm:$0xf]
    %v1404 = vld [vmem:[%s14 + $0x8] sm:$0xf]
    %v1405 = vld [vmem:[%s14 + $0xc] sm:$0xf]
    %v1406 = vld [vmem:[%s14 + $0x10] sm:$0xf]
    %v1407 = vld [vmem:[%s14 + $0x14] sm:$0xf]
    %v1408 = vld [vmem:[%s14 + $0x18] sm:$0xf]
    %v1409 = vld [vmem:[%s14 + $0x1c] sm:$0xf]
    %v1410 = vld [vmem:[%s15] sm:$0x1]
    %v1412 = vlaneseq
    %v1413 = vshrl.u32 %v1412, 7
    %v1414 = vsub.s32 0, %v1413
    %v1415 = vrot.slane %v1410, %v1414
    %v1425 = vunpack.c.l.b16 %v1402
    %v1426 = vunpack.c.l.b16 %v1403
    %v1427 = vunpack.c.l.b16 %v1404
    %v1428 = vunpack.c.l.b16 %v1405
    %v1429 = vunpack.c.l.b16 %v1406
    %v1430 = vunpack.c.l.b16 %v1407
    %v1431 = vunpack.c.l.b16 %v1408
    %v1432 = vunpack.c.l.b16 %v1409
    %v1433 = vpack.c.b16 %v1426, %v1425
    %v1434 = vpack.c.b16 %v1428, %v1427
    %v1435 = vpack.c.b16 %v1430, %v1429
    %v1436 = vpack.c.b16 %v1432, %v1431
    %vm1441 = vcmask 523264
    %v1443 = vsel %vm1441, %v1401, 0
    %1445 = vmatprep.subr.bf16.mxu0 0
    %1446 = vmatpush1.bf16.msra.mxu0 0
    %1447 = vmatprep.subr.bf16.mxu0 0
    %1448 = vmatpush1.bf16.msra.mxu0 0
    %1449 = vmatprep.subr.bf16.mxu0 0
    %1450 = vmatpush1.bf16.msra.mxu0 0
    %1451 = vmatprep.subr.bf16.mxu0 0
    %1452 = vmatpush1.bf16.msra.mxu0 0
    %1453 = vmatprep.subr.bf16.mxu0 0
    %1454 = vmatpush1.bf16.msra.mxu0 %v1436
    %1455 = vmatprep.subr.bf16.mxu0 0
    %1456 = vmatpush1.bf16.msra.mxu0 %v1435
    %1457 = vmatprep.subr.bf16.mxu0 0
    %1458 = vmatpush1.bf16.msra.mxu0 %v1434
    %1459 = vmatprep.subr.bf16.mxu0 0
    %1460 = vmatpush1.bf16.msra.mxu0 %v1433
    %1461 = vmatprep.subr.bf16.mxu0 0
    %1462 = vmatpush2.bf16.msra.mxu0 0
    %1463 = vmatprep.subr.bf16.mxu0 0
    %1464 = vmatpush2.bf16.msra.mxu0 0
    %1465 = vmatprep.subr.bf16.mxu0 0
    %1466 = vmatpush2.bf16.msra.mxu0 0
    %1467 = vmatprep.subr.bf16.mxu0 0
    %1468 = vmatpush2.bf16.msra.mxu0 0
    %1469 = vmatprep.subr.bf16.mxu0 0
    %1470 = vmatpush2.bf16.msra.mxu0 0
    %1471 = vmatprep.subr.bf16.mxu0 0
    %1472 = vmatpush2.bf16.msra.mxu0 0
    %1473 = vmatprep.subr.bf16.mxu0 0
    %1474 = vmatpush2.bf16.msra.mxu0 0
    %1475 = vmatprep.subr.bf16.mxu0 0
    %1476 = vmatpush2.bf16.msra.mxu0 0
    %1477 = vmatprep.mubr.bf16.mxu0 0
    %1478 = vmatmul.mubr.bf16.gmra.mxu0 %v1443
    %v1479 = vpop.f32.mrf.mxu0
    %v1480 = vadd.f32 %v1415, %v1479
    %v1481 = vpop.f32.mrf.mxu0
    %v1482 = vpop.f32.mrf.mxu0
    %v1483 = vpop.f32.mrf.mxu0
    %1484 = vdwg.mxu0
    %1486 = vrot.lane.b32.xlu0 %v1480, 16
    %v1487 = vpop.permute.xlu0 %1486
    %vm1489 = vcmask 130048
    %v1490 = vsel %vm1489, %v1209, %v1487
    %vm1491 = vcmask 154624
    %1492 = vst.msk [vmem:[#allocation2] sm:$0xff] %vm1491, %v1490
    // Predicated region
    $region66: #{tpu_custom_call.1} parent=1 // pred_check
      _
    $region67: #{tpu_custom_call.1} parent=1 // pred_check_branch
      %1494 = sbr.rel (0) target = $region69
    $region68: #{tpu_custom_call.1} parent=1 // pred_region
      %s1496 = ssub.s32 128, 128
      %1497 = vsyncadd [#allocation3], %s1496
      %s1499 = sshll.u32 [#allocation2], 4
      %s1500 = int_to_ptr.vmem [resolvable:$true] %s1499
      %1502 = dma.vmem_to_hbm [thread:$0]  %s1500, 128, %s16, [#allocation3]
    $region69: #{tpu_custom_call.1} parent=1 // pred_fallthru
      _
    // Predicated region
    $region70: #{tpu_custom_call.1} parent=1 // pred_check
      _
    $region71: #{tpu_custom_call.1} parent=1 // pred_check_branch
      %1504 = sbr.rel (0) target = $region73
    $region72: #{tpu_custom_call.1} parent=1 // pred_region
      %1505 = dma.done [#allocation3], 128
    $region73: #{tpu_custom_call.1} parent=1 // pred_fallthru
      _
    %1506 = vsyncpa [#allocation3], 1

</llo_original>
